<compile_context>
chip_gen: v7x
topology: tpu7x:2x2x1
jax: 0.10.0
libtpu: 0.0.40
codegen_flags: <defaults>
</compile_context>

<pallas_src>
import functools
import math

import jax
import jax.numpy as jnp
import numpy as np
from jax import lax
from jax.experimental import pallas as pl
from jax.experimental.pallas import tpu as pltpu

LANE = 128      # TPU lane width
SUBLANE = 8     # TPU sublane width


def _round_up(x, m):
    return (x + m - 1) // m * m


# ---------------------------------------------------------------------------
# Pallas kernels
# ---------------------------------------------------------------------------

def _conv_bn_relu_kernel(p_ref, w_ref, scale_ref, bias_ref, o_ref):
    """One row-tile of: im2col-GEMM + folded BatchNorm + ReLU.

    p_ref:     [TM, K]        bf16 im2col patches (rows ordered (n, h_out, w_out))
    w_ref:     [K, Cout_pad]  bf16 weights (Cout padded to 128 lanes)
    scale_ref: [1, Cout_pad]  f32  gamma / sqrt(running_var + eps)   (0 in padding)
    bias_ref:  [1, Cout_pad]  f32  beta + (conv_bias - mean) * scale (0 in padding)
    o_ref:     [TM, Cout_pad] bf16
    """
    acc = jnp.dot(p_ref[...], w_ref[...], preferred_element_type=jnp.float32)
    y = acc * scale_ref[...] + bias_ref[...]
    o_ref[...] = jnp.maximum(y, 0.0).astype(o_ref.dtype)


def _proj_kernel(x_ref, w_ref, b_ref, o_ref):
    """One row-tile of the GRU input projection: x @ W_ih + b_ih (f32 out)."""
    o_ref[...] = (jnp.dot(x_ref[...], w_ref[...],
                          preferred_element_type=jnp.float32)
                  + b_ref[...]).astype(o_ref.dtype)


def _gru_recurrence_kernel(gx_ref, whh_ref, bhh_ref, h_ref, *,
                           n_pad, n_steps, hidden):
    """Sequential GRU recurrence over precomputed input projections.

    gx_ref:  [T*Npad, 3H_pad] f32   rows ordered (t, n); cols (r | z | n | pad)
    whh_ref: [H, 3H]          f32
    bhh_ref: [1, 3H]          f32
    h_ref:   [Npad, H]        f32   final hidden state
    """
    w_hh = whh_ref[...]
    b_hh = bhh_ref[...]

    def step(t, h):
        start = pl.multiple_of(t * n_pad, SUBLANE)
        gx = gx_ref[pl.ds(start, n_pad), :]                                  # [Npad, 3Hp]
        gh = jnp.dot(h, w_hh, preferred_element_type=jnp.float32) + b_hh     # [Npad, 3H]
        r = jax.nn.sigmoid(gx[:, :hidden] + gh[:, :hidden])
        z = jax.nn.sigmoid(gx[:, hidden:2 * hidden] + gh[:, hidden:2 * hidden])
        c = jnp.tanh(gx[:, 2 * hidden:3 * hidden] + r * gh[:, 2 * hidden:])
        return (1.0 - z) * c + z * h

    h0 = jnp.zeros((n_pad, hidden), jnp.float32)
    h_ref[...] = lax.fori_loop(0, n_steps, step, h0).astype(h_ref.dtype)


# ---------------------------------------------------------------------------
# pallas_call wrappers
# ---------------------------------------------------------------------------

def _conv_bn_relu(patches, w_mat, scale, bias, *, tile_rows=512):
    """Row-gridded fused conv-GEMM + BN + ReLU."""
    p_rows, k_dim = patches.shape
    c_out = w_mat.shape[1]                       # already 128-lane padded
    tm = min(tile_rows, _round_up(p_rows, SUBLANE))
    p_pad = _round_up(p_rows, tm)
    if p_pad != p_rows:
        patches = jnp.pad(patches, ((0, p_pad - p_rows), (0, 0)))
    out = pl.pallas_call(
        _conv_bn_relu_kernel,
        out_shape=jax.ShapeDtypeStruct((p_pad, c_out), jnp.bfloat16),
        grid=(p_pad // tm,),
        in_specs=[
            pl.BlockSpec((tm, k_dim), lambda i: (i, 0)),
            pl.BlockSpec((k_dim, c_out), lambda i: (0, 0)),
            pl.BlockSpec((1, c_out), lambda i: (0, 0)),
            pl.BlockSpec((1, c_out), lambda i: (0, 0)),
        ],
        out_specs=pl.BlockSpec((tm, c_out), lambda i: (i, 0)),
        compiler_params=pltpu.CompilerParams(
            dimension_semantics=("parallel",)),
    )(patches, w_mat, scale, bias)
    return out[:p_rows] if p_pad != p_rows else out


def _gru_input_proj(x_flat, wih_p, bih_p, *, tile_rows=512):
    """Row-gridded GRU input projection for all timesteps at once."""
    rows, d = x_flat.shape
    lane3h = wih_p.shape[1]
    tm = min(tile_rows, _round_up(rows, SUBLANE))
    rows_pad = _round_up(rows, tm)
    if rows_pad != rows:
        x_flat = jnp.pad(x_flat, ((0, rows_pad - rows), (0, 0)))
    gx = pl.pallas_call(
        _proj_kernel,
        out_shape=jax.ShapeDtypeStruct((rows_pad, lane3h), jnp.float32),
        grid=(rows_pad // tm,),
        in_specs=[
            pl.BlockSpec((tm, d), lambda i: (i, 0)),
            pl.BlockSpec((d, lane3h), lambda i: (0, 0)),
            pl.BlockSpec((1, lane3h), lambda i: (0, 0)),
        ],
        out_specs=pl.BlockSpec((tm, lane3h), lambda i: (i, 0)),
        compiler_params=pltpu.CompilerParams(
            dimension_semantics=("parallel",)),
    )(x_flat, wih_p, bih_p)
    return gx[:rows] if rows_pad != rows else gx


def _gru_recurrence(gx_all, whh_t, bhh, *, n_pad, n_steps):
    hidden = whh_t.shape[0]
    kernel = functools.partial(_gru_recurrence_kernel,
                               n_pad=n_pad, n_steps=n_steps, hidden=hidden)
    return pl.pallas_call(
        kernel,
        out_shape=jax.ShapeDtypeStruct((n_pad, hidden), jnp.float32),
    )(gx_all, whh_t, bhh)


# ---------------------------------------------------------------------------
# Layout plumbing (XLA wrapper side)
# ---------------------------------------------------------------------------

def _im2col_nhwc(x, ksize, stride, pad):
    """x: [N, H, W, C] -> patches [N*Ho*Wo, C*k*k], columns ordered (c, kh, kw)."""
    n, h, w, c = x.shape
    h_out = (h - ksize + 2 * pad) // stride + 1
    w_out = (w - ksize + 2 * pad) // stride + 1
    xp = jnp.pad(x, ((0, 0), (pad, pad), (pad, pad), (0, 0)))
    taps = []
    for kh in range(ksize):
        for kw in range(ksize):
            taps.append(xp[:, kh:kh + stride * h_out:stride,
                           kw:kw + stride * w_out:stride, :])       # [N, Ho, Wo, C]
    pats = jnp.stack(taps, axis=-1)                                 # [N, Ho, Wo, C, k*k]
    pats = pats.reshape(n * h_out * w_out, c * ksize * ksize)       # col idx = c*k*k + kh*k + kw
    return pats, h_out, w_out


def reference_encoder_forward(inputs, params, *, n_mel_channels, ksize, stride, pad):
    """Pallas-backed ReferenceEncoder.forward (input_lengths=None path)."""
    n = inputs.shape[0]
    n_pad = _round_up(max(n, SUBLANE), SUBLANE)
    # NHWC activation; channels carried lane-padded between layers.
    x = inputs.reshape(n, -1, n_mel_channels, 1).astype(jnp.bfloat16)
    for w_mat, scale, bias in params["convs"]:
        patches, h_out, w_out = _im2col_nhwc(x, ksize, stride, pad)
        y = _conv_bn_relu(patches, w_mat, scale, bias)                     # [P, 128] bf16
        x = y.reshape(n, h_out, w_out, LANE)                               # NHWC, padded C

    t_steps, w_last = x.shape[1], x.shape[2]
    d_pad = w_last * LANE
    # Rows ordered (t, n) with n padded to the sublane width; the GRU input weight
    # matrix was pre-permuted/padded to consume this (w, c_pad) column ordering, so
    # no per-layer transposes are needed — only this one small (t, n) relayout.
    x_seq = x.reshape(n, t_steps, d_pad)
    x_tn = jnp.transpose(x_seq, (1, 0, 2))                                 # [T, N, Dp]
    x_tn = jnp.pad(x_tn, ((0, 0), (0, n_pad - n), (0, 0)))
    x_flat = x_tn.reshape(t_steps * n_pad, d_pad)                          # bf16

    wih_p, bih_p, whh_t, bhh = params["gru"]
    gx_all = _gru_input_proj(x_flat, wih_p, bih_p)                         # [T*Npad, 3Hp] f32
    h_pad = _gru_recurrence(gx_all, whh_t, bhh, n_pad=n_pad, n_steps=t_steps)
    return h_pad[:n]                                                       # [N, gru_hidden]


# ---------------------------------------------------------------------------
# Parameter preparation (one-time weight plumbing)
# ---------------------------------------------------------------------------

def _fold_conv_bn(w, b, gamma, beta, mean, var, eps, c_in_pad, c_out_pad):
    c_out, c_in, kh, kw = w.shape
    scale = gamma / jnp.sqrt(var + eps)
    bias = beta + (b - mean) * scale
    w_p = jnp.zeros((c_out, c_in_pad, kh, kw), jnp.float32).at[:, :c_in].set(w)
    w_mat = w_p.reshape(c_out, c_in_pad * kh * kw).T                       # [K, Cout]
    w_mat_p = jnp.zeros((w_mat.shape[0], c_out_pad), jnp.float32).at[:, :c_out].set(w_mat)
    scale_p = jnp.zeros((1, c_out_pad), jnp.float32).at[0, :c_out].set(scale)
    bias_p = jnp.zeros((1, c_out_pad), jnp.float32).at[0, :c_out].set(bias)
    return w_mat_p.astype(jnp.bfloat16), scale_p, bias_p


def _prep_gru_in_weights(wih_t, bih, c_last, w_last, c_pad, lane3h):
    """Permute/pad W_ih rows from torch's (c, w) ordering to NHWC (w, c_pad)."""
    d, three_h = wih_t.shape
    assert d == c_last * w_last
    wih_r = wih_t.reshape(c_last, w_last, three_h).transpose(1, 0, 2)      # [W, C, 3H]
    wih_p = jnp.zeros((w_last, c_pad, lane3h), jnp.float32)
    wih_p = wih_p.at[:, :c_last, :three_h].set(wih_r)
    wih_p = wih_p.reshape(w_last * c_pad, lane3h).astype(jnp.bfloat16)
    bih_p = jnp.zeros((1, lane3h), jnp.float32).at[0, :three_h].set(bih[0])
    return wih_p, bih_p


# ---------------------------------------------------------------------------
# Pure-JAX reference (mirrors the PyTorch module, inference-mode BN)
# ---------------------------------------------------------------------------

def reference_encoder_ref(inputs, raw_params, *, n_mel_channels, stride, pad, eps):
    hp = lax.Precision.HIGHEST
    n = inputs.shape[0]
    out = inputs.reshape(n, 1, -1, n_mel_channels)
    for w, b, gamma, beta, mean, var in raw_params["convs"]:
        out = lax.conv_general_dilated(
            out, w, window_strides=(stride, stride),
            padding=((pad, pad), (pad, pad)),
            dimension_numbers=("NCHW", "OIHW", "NCHW"), precision=hp)
        out = out + b[None, :, None, None]
        out = (out - mean[None, :, None, None]) / jnp.sqrt(var[None, :, None, None] + eps)
        out = out * gamma[None, :, None, None] + beta[None, :, None, None]
        out = jnp.maximum(out, 0.0)
    _, c_last, t_steps, w_last = out.shape
    x = out.transpose(0, 2, 1, 3).reshape(n, t_steps, c_last * w_last)
    wih_t, whh_t, bih, bhh = raw_params["gru"]
    hidden = whh_t.shape[0]
    h = jnp.zeros((n, hidden), jnp.float32)
    for t in range(t_steps):
        gx = jnp.dot(x[:, t, :], wih_t, precision=hp) + bih
        gh = jnp.dot(h, whh_t, precision=hp) + bhh
        r = jax.nn.sigmoid(gx[:, :hidden] + gh[:, :hidden])
        z = jax.nn.sigmoid(gx[:, hidden:2 * hidden] + gh[:, hidden:2 * hidden])
        cand = jnp.tanh(gx[:, 2 * hidden:] + r * gh[:, 2 * hidden:])
        h = (1.0 - z) * cand + z * h
    return h


if __name__ == "__main__":
    # --- small config consistent with a GST reference encoder ---
    n_mel_channels = 16
    conv_filters = [16, 32, 64]        # K = 3 conv layers
    ksize, stride, pad = 3, 2, 1
    gru_hidden = 32
    eps = 1e-5
    batch, t_y = 2, 32                 # inputs: [N, Ty, n_mels]

    keys = iter(jax.random.split(jax.random.PRNGKey(0), 64))

    # Conv + BN parameters; fold conv bias + inference-mode BN into (scale, bias).
    raw_convs, convs = [], []
    filters = [1] + conv_filters
    c_in_pad = 1                                     # layer-0 input has 1 channel
    for c_in, c_out in zip(filters[:-1], filters[1:]):
        fan_in = c_in * ksize * ksize
        w = jax.random.normal(next(keys), (c_out, c_in, ksize, ksize),
                              jnp.float32) / math.sqrt(fan_in)
        b = 0.1 * jax.random.normal(next(keys), (c_out,), jnp.float32)
        gamma = jax.random.uniform(next(keys), (c_out,), jnp.float32, 0.5, 1.5)
        beta = 0.1 * jax.random.normal(next(keys), (c_out,), jnp.float32)
        mean = 0.1 * jax.random.normal(next(keys), (c_out,), jnp.float32)
        var = jax.random.uniform(next(keys), (c_out,), jnp.float32, 0.5, 1.5)
        raw_convs.append((w, b, gamma, beta, mean, var))
        convs.append(_fold_conv_bn(w, b, gamma, beta, mean, var, eps,
                                   c_in_pad=c_in_pad, c_out_pad=LANE))
        c_in_pad = LANE                              # carry lane-padded channels forward

    # GRU input size = conv_filters[-1] * (mel dim after K stride-2 convs)
    out_mel = n_mel_channels
    for _ in conv_filters:
        out_mel = (out_mel - ksize + 2 * pad) // stride + 1
    gru_input = conv_filters[-1] * out_mel           # 64 * 2 = 128

    kq = 1.0 / math.sqrt(gru_hidden)
    wih_t = jax.random.uniform(next(keys), (gru_input, 3 * gru_hidden), jnp.float32, -kq, kq)
    whh_t = jax.random.uniform(next(keys), (gru_hidden, 3 * gru_hidden), jnp.float32, -kq, kq)
    bih = jax.random.uniform(next(keys), (1, 3 * gru_hidden), jnp.float32, -kq, kq)
    bhh = jax.random.uniform(next(keys), (1, 3 * gru_hidden), jnp.float32, -kq, kq)

    lane3h = _round_up(3 * gru_hidden, LANE)
    wih_p, bih_p = _prep_gru_in_weights(wih_t, bih, c_last=conv_filters[-1],
                                        w_last=out_mel, c_pad=LANE, lane3h=lane3h)

    params = {"convs": convs, "gru": (wih_p, bih_p, whh_t, bhh)}
    raw_params = {"convs": raw_convs, "gru": (wih_t, whh_t, bih, bhh)}

    inputs = jax.random.normal(next(keys), (batch, t_y, n_mel_channels), jnp.float32)

    fwd = jax.jit(functools.partial(
        reference_encoder_forward, n_mel_channels=n_mel_channels,
        ksize=ksize, stride=stride, pad=pad))
    h_final = jax.block_until_ready(fwd(inputs, params))

    h_ref = reference_encoder_ref(
        inputs, raw_params, n_mel_channels=n_mel_channels,
        stride=stride, pad=pad, eps=eps)

    assert h_final.shape == (batch, gru_hidden)
    # Tolerance reflects bf16 MXU operands through 3 conv layers + GRU projection.
    np.testing.assert_allclose(np.asarray(h_final, dtype=np.float32),
                               np.asarray(h_ref, dtype=np.float32),
                               rtol=3e-2, atol=3e-2)
    print("KERNEL_OK")
</pallas_src>

<mosaic_0001>
module attributes {stable_mosaic.version = 11 : i64} {
  func.func @_conv_bn_relu_kernel(%arg0: i32, %arg1: memref<256x9xbf16, #tpu.memory_space<vmem>>, %arg2: memref<9x128xbf16, #tpu.memory_space<vmem>>, %arg3: memref<1x128xf32, #tpu.memory_space<vmem>>, %arg4: memref<1x128xf32, #tpu.memory_space<vmem>>, %arg5: memref<256x128xbf16, #tpu.memory_space<vmem>>) attributes {dimension_semantics = [#tpu.dimension_semantics<parallel>], iteration_bounds = array<i64: 1>, scalar_prefetch = 0 : i64, scratch_operands = 0 : i64, tpu.core_type = #tpu.core_type<tc>, window_params = [{transform_indices = @transform_0, window_bounds = array<i64: 256, 9>}, {pipeline_mode = #tpu.pipeline_mode<synchronous>, transform_indices = @transform_1, window_bounds = array<i64: 9, 128>}, {pipeline_mode = #tpu.pipeline_mode<synchronous>, transform_indices = @transform_2, window_bounds = array<i64: 1, 128>}, {pipeline_mode = #tpu.pipeline_mode<synchronous>, transform_indices = @transform_3, window_bounds = array<i64: 1, 128>}, {transform_indices = @transform_4, window_bounds = array<i64: 256, 128>}]} {
    %c0 = arith.constant 0 : index
    %c0_0 = arith.constant 0 : index
    %0 = vector.load %arg1[%c0, %c0_0] : memref<256x9xbf16, #tpu.memory_space<vmem>>, vector<256x9xbf16>
    %c0_1 = arith.constant 0 : index
    %c0_2 = arith.constant 0 : index
    %1 = vector.load %arg2[%c0_1, %c0_2] : memref<9x128xbf16, #tpu.memory_space<vmem>>, vector<9x128xbf16>
    %cst = arith.constant dense<0.000000e+00> : vector<256x128xf32>
    %2 = tpu.matmul %0, %1, %cst {dimension_numbers = #tpu.dot_dimension_numbers<[1], [0], [0], [1], [0, 0, 1, 1], [], []>} : vector<256x9xbf16>, vector<9x128xbf16>, vector<256x128xf32> -> vector<256x128xf32>
    %c0_3 = arith.constant 0 : index
    %c0_4 = arith.constant 0 : index
    %3 = vector.load %arg3[%c0_3, %c0_4] : memref<1x128xf32, #tpu.memory_space<vmem>>, vector<1x128xf32>
    %4 = vector.broadcast %3 : vector<1x128xf32> to vector<256x128xf32>
    %5 = arith.mulf %2, %4 : vector<256x128xf32>
    %c0_5 = arith.constant 0 : index
    %c0_6 = arith.constant 0 : index
    %6 = vector.load %arg4[%c0_5, %c0_6] : memref<1x128xf32, #tpu.memory_space<vmem>>, vector<1x128xf32>
    %7 = vector.broadcast %6 : vector<1x128xf32> to vector<256x128xf32>
    %8 = arith.addf %5, %7 : vector<256x128xf32>
    %cst_7 = arith.constant 0.000000e+00 : f32
    %9 = vector.broadcast %cst_7 : f32 to vector<256x128xf32>
    %10 = arith.maximumf %8, %9 : vector<256x128xf32>
    %11 = arith.truncf %10 : vector<256x128xf32> to vector<256x128xbf16>
    %c0_8 = arith.constant 0 : index
    %c0_9 = arith.constant 0 : index
    %12 = vector.load %arg5[%c0_8, %c0_9] : memref<256x128xbf16, #tpu.memory_space<vmem>>, vector<256x128xbf16>
    tpu.vector_store %arg5[%c0_8, %c0_9], %11 {strides = array<i32>} : memref<256x128xbf16, #tpu.memory_space<vmem>>, vector<256x128xbf16>,
    return
  }
  func.func @transform_0(%arg0: i32) -> (i32, i32) {
    %c0_i32 = arith.constant 0 : i32
    %c0_i32_0 = arith.constant 0 : i32
    return %arg0, %c0_i32 : i32, i32
  }
  func.func @transform_1(%arg0: i32) -> (i32, i32) {
    %c0_i32 = arith.constant 0 : i32
    %c0_i32_0 = arith.constant 0 : i32
    %c0_i32_1 = arith.constant 0 : i32
    return %c0_i32, %c0_i32_0 : i32, i32
  }
  func.func @transform_2(%arg0: i32) -> (i32, i32) {
    %c0_i32 = arith.constant 0 : i32
    %c0_i32_0 = arith.constant 0 : i32
    %c0_i32_1 = arith.constant 0 : i32
    return %c0_i32, %c0_i32_0 : i32, i32
  }
  func.func @transform_3(%arg0: i32) -> (i32, i32) {
    %c0_i32 = arith.constant 0 : i32
    %c0_i32_0 = arith.constant 0 : i32
    %c0_i32_1 = arith.constant 0 : i32
    return %c0_i32, %c0_i32_0 : i32, i32
  }
  func.func @transform_4(%arg0: i32) -> (i32, i32) {
    %c0_i32 = arith.constant 0 : i32
    %c0_i32_0 = arith.constant 0 : i32
    return %arg0, %c0_i32 : i32, i32
  }
}

module attributes {stable_mosaic.version = 11 : i64} {
  func.func @_conv_bn_relu_kernel(%arg0: i32, %arg1: memref<64x1152xbf16, #tpu.memory_space<vmem>>, %arg2: memref<1152x128xbf16, #tpu.memory_space<vmem>>, %arg3: memref<1x128xf32, #tpu.memory_space<vmem>>, %arg4: memref<1x128xf32, #tpu.memory_space<vmem>>, %arg5: memref<64x128xbf16, #tpu.memory_space<vmem>>) attributes {dimension_semantics = [#tpu.dimension_semantics<parallel>], iteration_bounds = array<i64: 1>, scalar_prefetch = 0 : i64, scratch_operands = 0 : i64, tpu.core_type = #tpu.core_type<tc>, window_params = [{transform_indices = @transform_0, window_bounds = array<i64: 64, 1152>}, {pipeline_mode = #tpu.pipeline_mode<synchronous>, transform_indices = @transform_1, window_bounds = array<i64: 1152, 128>}, {pipeline_mode = #tpu.pipeline_mode<synchronous>, transform_indices = @transform_2, window_bounds = array<i64: 1, 128>}, {pipeline_mode = #tpu.pipeline_mode<synchronous>, transform_indices = @transform_3, window_bounds = array<i64: 1, 128>}, {transform_indices = @transform_4, window_bounds = array<i64: 64, 128>}]} {
    %c0 = arith.constant 0 : index
    %c0_0 = arith.constant 0 : index
    %0 = vector.load %arg1[%c0, %c0_0] : memref<64x1152xbf16, #tpu.memory_space<vmem>>, vector<64x1152xbf16>
    %c0_1 = arith.constant 0 : index
    %c0_2 = arith.constant 0 : index
    %1 = vector.load %arg2[%c0_1, %c0_2] : memref<1152x128xbf16, #tpu.memory_space<vmem>>, vector<1152x128xbf16>
    %cst = arith.constant dense<0.000000e+00> : vector<64x128xf32>
    %2 = tpu.matmul %0, %1, %cst {dimension_numbers = #tpu.dot_dimension_numbers<[1], [0], [0], [1], [0, 0, 1, 1], [], []>} : vector<64x1152xbf16>, vector<1152x128xbf16>, vector<64x128xf32> -> vector<64x128xf32>
    %c0_3 = arith.constant 0 : index
    %c0_4 = arith.constant 0 : index
    %3 = vector.load %arg3[%c0_3, %c0_4] : memref<1x128xf32, #tpu.memory_space<vmem>>, vector<1x128xf32>
    %4 = vector.broadcast %3 : vector<1x128xf32> to vector<64x128xf32>
    %5 = arith.mulf %2, %4 : vector<64x128xf32>
    %c0_5 = arith.constant 0 : index
    %c0_6 = arith.constant 0 : index
    %6 = vector.load %arg4[%c0_5, %c0_6] : memref<1x128xf32, #tpu.memory_space<vmem>>, vector<1x128xf32>
    %7 = vector.broadcast %6 : vector<1x128xf32> to vector<64x128xf32>
    %8 = arith.addf %5, %7 : vector<64x128xf32>
    %cst_7 = arith.constant 0.000000e+00 : f32
    %9 = vector.broadcast %cst_7 : f32 to vector<64x128xf32>
    %10 = arith.maximumf %8, %9 : vector<64x128xf32>
    %11 = arith.truncf %10 : vector<64x128xf32> to vector<64x128xbf16>
    %c0_8 = arith.constant 0 : index
    %c0_9 = arith.constant 0 : index
    %12 = vector.load %arg5[%c0_8, %c0_9] : memref<64x128xbf16, #tpu.memory_space<vmem>>, vector<64x128xbf16>
    tpu.vector_store %arg5[%c0_8, %c0_9], %11 {strides = array<i32>} : memref<64x128xbf16, #tpu.memory_space<vmem>>, vector<64x128xbf16>,
    return
  }
  func.func @transform_0(%arg0: i32) -> (i32, i32) {
    %c0_i32 = arith.constant 0 : i32
    %c0_i32_0 = arith.constant 0 : i32
    return %arg0, %c0_i32 : i32, i32
  }
  func.func @transform_1(%arg0: i32) -> (i32, i32) {
    %c0_i32 = arith.constant 0 : i32
    %c0_i32_0 = arith.constant 0 : i32
    %c0_i32_1 = arith.constant 0 : i32
    return %c0_i32, %c0_i32_0 : i32, i32
  }
  func.func @transform_2(%arg0: i32) -> (i32, i32) {
    %c0_i32 = arith.constant 0 : i32
    %c0_i32_0 = arith.constant 0 : i32
    %c0_i32_1 = arith.constant 0 : i32
    return %c0_i32, %c0_i32_0 : i32, i32
  }
  func.func @transform_3(%arg0: i32) -> (i32, i32) {
    %c0_i32 = arith.constant 0 : i32
    %c0_i32_0 = arith.constant 0 : i32
    %c0_i32_1 = arith.constant 0 : i32
    return %c0_i32, %c0_i32_0 : i32, i32
  }
  func.func @transform_4(%arg0: i32) -> (i32, i32) {
    %c0_i32 = arith.constant 0 : i32
    %c0_i32_0 = arith.constant 0 : i32
    return %arg0, %c0_i32 : i32, i32
  }
}

module attributes {stable_mosaic.version = 11 : i64} {
  func.func @_conv_bn_relu_kernel(%arg0: i32, %arg1: memref<16x1152xbf16, #tpu.memory_space<vmem>>, %arg2: memref<1152x128xbf16, #tpu.memory_space<vmem>>, %arg3: memref<1x128xf32, #tpu.memory_space<vmem>>, %arg4: memref<1x128xf32, #tpu.memory_space<vmem>>, %arg5: memref<16x128xbf16, #tpu.memory_space<vmem>>) attributes {dimension_semantics = [#tpu.dimension_semantics<parallel>], iteration_bounds = array<i64: 1>, scalar_prefetch = 0 : i64, scratch_operands = 0 : i64, tpu.core_type = #tpu.core_type<tc>, window_params = [{transform_indices = @transform_0, window_bounds = array<i64: 16, 1152>}, {pipeline_mode = #tpu.pipeline_mode<synchronous>, transform_indices = @transform_1, window_bounds = array<i64: 1152, 128>}, {pipeline_mode = #tpu.pipeline_mode<synchronous>, transform_indices = @transform_2, window_bounds = array<i64: 1, 128>}, {pipeline_mode = #tpu.pipeline_mode<synchronous>, transform_indices = @transform_3, window_bounds = array<i64: 1, 128>}, {transform_indices = @transform_4, window_bounds = array<i64: 16, 128>}]} {
    %c0 = arith.constant 0 : index
    %c0_0 = arith.constant 0 : index
    %0 = vector.load %arg1[%c0, %c0_0] : memref<16x1152xbf16, #tpu.memory_space<vmem>>, vector<16x1152xbf16>
    %c0_1 = arith.constant 0 : index
    %c0_2 = arith.constant 0 : index
    %1 = vector.load %arg2[%c0_1, %c0_2] : memref<1152x128xbf16, #tpu.memory_space<vmem>>, vector<1152x128xbf16>
    %cst = arith.constant dense<0.000000e+00> : vector<16x128xf32>
    %2 = tpu.matmul %0, %1, %cst {dimension_numbers = #tpu.dot_dimension_numbers<[1], [0], [0], [1], [0, 0, 1, 1], [], []>} : vector<16x1152xbf16>, vector<1152x128xbf16>, vector<16x128xf32> -> vector<16x128xf32>
    %c0_3 = arith.constant 0 : index
    %c0_4 = arith.constant 0 : index
    %3 = vector.load %arg3[%c0_3, %c0_4] : memref<1x128xf32, #tpu.memory_space<vmem>>, vector<1x128xf32>
    %4 = vector.broadcast %3 : vector<1x128xf32> to vector<16x128xf32>
    %5 = arith.mulf %2, %4 : vector<16x128xf32>
    %c0_5 = arith.constant 0 : index
    %c0_6 = arith.constant 0 : index
    %6 = vector.load %arg4[%c0_5, %c0_6] : memref<1x128xf32, #tpu.memory_space<vmem>>, vector<1x128xf32>
    %7 = vector.broadcast %6 : vector<1x128xf32> to vector<16x128xf32>
    %8 = arith.addf %5, %7 : vector<16x128xf32>
    %cst_7 = arith.constant 0.000000e+00 : f32
    %9 = vector.broadcast %cst_7 : f32 to vector<16x128xf32>
    %10 = arith.maximumf %8, %9 : vector<16x128xf32>
    %11 = arith.truncf %10 : vector<16x128xf32> to vector<16x128xbf16>
    %c0_8 = arith.constant 0 : index
    %c0_9 = arith.constant 0 : index
    %12 = vector.load %arg5[%c0_8, %c0_9] : memref<16x128xbf16, #tpu.memory_space<vmem>>, vector<16x128xbf16>
    tpu.vector_store %arg5[%c0_8, %c0_9], %11 {strides = array<i32>} : memref<16x128xbf16, #tpu.memory_space<vmem>>, vector<16x128xbf16>,
    return
  }
  func.func @transform_0(%arg0: i32) -> (i32, i32) {
    %c0_i32 = arith.constant 0 : i32
    %c0_i32_0 = arith.constant 0 : i32
    return %arg0, %c0_i32 : i32, i32
  }
  func.func @transform_1(%arg0: i32) -> (i32, i32) {
    %c0_i32 = arith.constant 0 : i32
    %c0_i32_0 = arith.constant 0 : i32
    %c0_i32_1 = arith.constant 0 : i32
    return %c0_i32, %c0_i32_0 : i32, i32
  }
  func.func @transform_2(%arg0: i32) -> (i32, i32) {
    %c0_i32 = arith.constant 0 : i32
    %c0_i32_0 = arith.constant 0 : i32
    %c0_i32_1 = arith.constant 0 : i32
    return %c0_i32, %c0_i32_0 : i32, i32
  }
  func.func @transform_3(%arg0: i32) -> (i32, i32) {
    %c0_i32 = arith.constant 0 : i32
    %c0_i32_0 = arith.constant 0 : i32
    %c0_i32_1 = arith.constant 0 : i32
    return %c0_i32, %c0_i32_0 : i32, i32
  }
  func.func @transform_4(%arg0: i32) -> (i32, i32) {
    %c0_i32 = arith.constant 0 : i32
    %c0_i32_0 = arith.constant 0 : i32
    return %arg0, %c0_i32 : i32, i32
  }
}

module attributes {stable_mosaic.version = 11 : i64} {
  func.func @_proj_kernel(%arg0: i32, %arg1: memref<32x256xbf16, #tpu.memory_space<vmem>>, %arg2: memref<256x128xbf16, #tpu.memory_space<vmem>>, %arg3: memref<1x128xf32, #tpu.memory_space<vmem>>, %arg4: memref<32x128xf32, #tpu.memory_space<vmem>>) attributes {dimension_semantics = [#tpu.dimension_semantics<parallel>], iteration_bounds = array<i64: 1>, scalar_prefetch = 0 : i64, scratch_operands = 0 : i64, tpu.core_type = #tpu.core_type<tc>, window_params = [{transform_indices = @transform_0, window_bounds = array<i64: 32, 256>}, {pipeline_mode = #tpu.pipeline_mode<synchronous>, transform_indices = @transform_1, window_bounds = array<i64: 256, 128>}, {pipeline_mode = #tpu.pipeline_mode<synchronous>, transform_indices = @transform_2, window_bounds = array<i64: 1, 128>}, {transform_indices = @transform_3, window_bounds = array<i64: 32, 128>}]} {
    %c0 = arith.constant 0 : index
    %c0_0 = arith.constant 0 : index
    %0 = vector.load %arg1[%c0, %c0_0] : memref<32x256xbf16, #tpu.memory_space<vmem>>, vector<32x256xbf16>
    %c0_1 = arith.constant 0 : index
    %c0_2 = arith.constant 0 : index
    %1 = vector.load %arg2[%c0_1, %c0_2] : memref<256x128xbf16, #tpu.memory_space<vmem>>, vector<256x128xbf16>
    %cst = arith.constant dense<0.000000e+00> : vector<32x128xf32>
    %2 = tpu.matmul %0, %1, %cst {dimension_numbers = #tpu.dot_dimension_numbers<[1], [0], [0], [1], [0, 0, 1, 1], [], []>} : vector<32x256xbf16>, vector<256x128xbf16>, vector<32x128xf32> -> vector<32x128xf32>
    %c0_3 = arith.constant 0 : index
    %c0_4 = arith.constant 0 : index
    %3 = vector.load %arg3[%c0_3, %c0_4] : memref<1x128xf32, #tpu.memory_space<vmem>>, vector<1x128xf32>
    %4 = vector.broadcast %3 : vector<1x128xf32> to vector<32x128xf32>
    %5 = arith.addf %2, %4 : vector<32x128xf32>
    %c0_5 = arith.constant 0 : index
    %c0_6 = arith.constant 0 : index
    %6 = vector.load %arg4[%c0_5, %c0_6] : memref<32x128xf32, #tpu.memory_space<vmem>>, vector<32x128xf32>
    tpu.vector_store %arg4[%c0_5, %c0_6], %5 {strides = array<i32>} : memref<32x128xf32, #tpu.memory_space<vmem>>, vector<32x128xf32>,
    return
  }
  func.func @transform_0(%arg0: i32) -> (i32, i32) {
    %c0_i32 = arith.constant 0 : i32
    %c0_i32_0 = arith.constant 0 : i32
    return %arg0, %c0_i32 : i32, i32
  }
  func.func @transform_1(%arg0: i32) -> (i32, i32) {
    %c0_i32 = arith.constant 0 : i32
    %c0_i32_0 = arith.constant 0 : i32
    %c0_i32_1 = arith.constant 0 : i32
    return %c0_i32, %c0_i32_0 : i32, i32
  }
  func.func @transform_2(%arg0: i32) -> (i32, i32) {
    %c0_i32 = arith.constant 0 : i32
    %c0_i32_0 = arith.constant 0 : i32
    %c0_i32_1 = arith.constant 0 : i32
    return %c0_i32, %c0_i32_0 : i32, i32
  }
  func.func @transform_3(%arg0: i32) -> (i32, i32) {
    %c0_i32 = arith.constant 0 : i32
    %c0_i32_0 = arith.constant 0 : i32
    return %arg0, %c0_i32 : i32, i32
  }
}

module attributes {stable_mosaic.version = 11 : i64} {
  func.func @_gru_recurrence_kernel(%arg0: memref<32x128xf32, #tpu.memory_space<vmem>>, %arg1: memref<32x96xf32, #tpu.memory_space<vmem>>, %arg2: memref<1x96xf32, #tpu.memory_space<vmem>>, %arg3: memref<8x32xf32, #tpu.memory_space<vmem>>) attributes {dimension_semantics = [], scalar_prefetch = 0 : i64, scratch_operands = 0 : i64, tpu.core_type = #tpu.core_type<tc>} {
    %c0 = arith.constant 0 : index
    %c0_0 = arith.constant 0 : index
    %0 = vector.load %arg1[%c0, %c0_0] : memref<32x96xf32, #tpu.memory_space<vmem>>, vector<32x96xf32>
    %c0_1 = arith.constant 0 : index
    %c0_2 = arith.constant 0 : index
    %1 = vector.load %arg2[%c0_1, %c0_2] : memref<1x96xf32, #tpu.memory_space<vmem>>, vector<1x96xf32>
    %cst = arith.constant 0.000000e+00 : f32
    %2 = vector.broadcast %cst : f32 to vector<8x32xf32>
    %c0_i32 = arith.constant 0 : i32
    %c4_i32 = arith.constant 4 : i32
    %3 = arith.addi %c0_i32, %c4_i32 : i32
    %c1_i32 = arith.constant 1 : i32
    %4 = scf.for %arg4 = %c0_i32 to %3 step %c1_i32 iter_args(%arg5 = %2) -> (vector<8x32xf32>)  : i32 {
      %c8_i32 = arith.constant 8 : i32
      %6 = arith.muli %arg4, %c8_i32 : i32
      %7 = tpu.assume_multiple %6, 8 : i32
      %8 = arith.index_cast %7 : i32 to index
      %c0_6 = arith.constant 0 : index
      %9 = vector.load %arg0[%8, %c0_6] : memref<32x128xf32, #tpu.memory_space<vmem>>, vector<8x128xf32>
      %cst_7 = arith.constant dense<0.000000e+00> : vector<8x96xf32>
      %10 = tpu.matmul %arg5, %0, %cst_7 {dimension_numbers = #tpu.dot_dimension_numbers<[1], [0], [0], [1], [0, 0, 1, 1], [], []>} : vector<8x32xf32>, vector<32x96xf32>, vector<8x96xf32> -> vector<8x96xf32>
      %11 = vector.broadcast %1 : vector<1x96xf32> to vector<8x96xf32>
      %12 = arith.addf %10, %11 : vector<8x96xf32>
      %13 = vector.extract_strided_slice %9 {offsets = [0, 0], sizes = [8, 32], strides = [1, 1]} : vector<8x128xf32> to vector<8x32xf32>
      %14 = vector.extract_strided_slice %12 {offsets = [0, 0], sizes = [8, 32], strides = [1, 1]} : vector<8x96xf32> to vector<8x32xf32>
      %15 = arith.addf %13, %14 : vector<8x32xf32>
      %16 = arith.negf %15 : vector<8x32xf32>
      %17 = math.exp %16 : vector<8x32xf32>
      %cst_8 = arith.constant 1.000000e+00 : f32
      %18 = vector.broadcast %cst_8 : f32 to vector<8x32xf32>
      %19 = arith.addf %18, %17 : vector<8x32xf32>
      %20 = arith.divf %18, %19 : vector<8x32xf32>
      %21 = vector.extract_strided_slice %9 {offsets = [0, 32], sizes = [8, 32], strides = [1, 1]} : vector<8x128xf32> to vector<8x32xf32>
      %22 = vector.extract_strided_slice %12 {offsets = [0, 32], sizes = [8, 32], strides = [1, 1]} : vector<8x96xf32> to vector<8x32xf32>
      %23 = arith.addf %21, %22 : vector<8x32xf32>
      %24 = arith.negf %23 : vector<8x32xf32>
      %25 = math.exp %24 : vector<8x32xf32>
      %cst_9 = arith.constant 1.000000e+00 : f32
      %26 = vector.broadcast %cst_9 : f32 to vector<8x32xf32>
      %27 = arith.addf %26, %25 : vector<8x32xf32>
      %28 = arith.divf %26, %27 : vector<8x32xf32>
      %29 = vector.extract_strided_slice %9 {offsets = [0, 64], sizes = [8, 32], strides = [1, 1]} : vector<8x128xf32> to vector<8x32xf32>
      %30 = vector.extract_strided_slice %12 {offsets = [0, 64], sizes = [8, 32], strides = [1, 1]} : vector<8x96xf32> to vector<8x32xf32>
      %31 = arith.mulf %20, %30 : vector<8x32xf32>
      %32 = arith.addf %29, %31 : vector<8x32xf32>
      %33 = math.tanh %32 : vector<8x32xf32>
      %cst_10 = arith.constant 1.000000e+00 : f32
      %34 = vector.broadcast %cst_10 : f32 to vector<8x32xf32>
      %35 = arith.subf %34, %28 : vector<8x32xf32>
      %36 = arith.mulf %35, %33 : vector<8x32xf32>
      %37 = arith.mulf %28, %arg5 : vector<8x32xf32>
      %38 = arith.addf %36, %37 : vector<8x32xf32>
      scf.yield %38 : vector<8x32xf32>
    }
    %c4_i32_3 = arith.constant 4 : i32
    %c0_4 = arith.constant 0 : index
    %c0_5 = arith.constant 0 : index
    %5 = vector.load %arg3[%c0_4, %c0_5] : memref<8x32xf32, #tpu.memory_space<vmem>>, vector<8x32xf32>
    tpu.vector_store %arg3[%c0_4, %c0_5], %4 {strides = array<i32>} : memref<8x32xf32, #tpu.memory_space<vmem>>, vector<8x32xf32>,
    return
  }
}

</mosaic_0001>

<llo_original>
// kernel: reference_encoder_forward.5
$region0: #{reference_encoder_forward.5}
  #allocation0 [shape = 'u32[]', space=smem, size = 0x4, offset = 0x4, fixed_abs, tag = 'smem constant byte address 0x4 - core index']
  #allocation1 [shape = 'u32[144,128]{1,0:T(1,128)}', space=vmem, size = 0x12000, scoped, tag = 'internal scratch']
  %s0 = inlined_call_operand.vmem [shape: bf16[256,9], index: 0, kind: input, shape index: {}]
  %s1 = inlined_call_operand.hbm [shape: bf16[9,128], index: 1, kind: input, shape index: {}]
  %s2 = inlined_call_operand.hbm [shape: f32[1,128], index: 2, kind: input, shape index: {}]
  %s3 = inlined_call_operand.hbm [shape: f32[1,128], index: 3, kind: input, shape index: {}]
  %s4 = inlined_call_operand.vmem [shape: bf16[256,128], index: 4, kind: output, shape index: {}]
  %s5 = sld [smem:[#allocation0]]
  $region38: #{reference_encoder_forward.5} parent=0
    _
  %s7 = ssub.s32 1, %s5
  %s8 = scalar_select 0, %s7, %s5
  $region1: #{reference_encoder_forward.5} parent=0
    #allocation2 [shape = 'u8[4096]{0}', space=vmem, size = 0x1000, scoped, tag = 'input window, operand 1, single buffered']
    #allocation3 [shape = 's32[1]{0}', space=sflag, size = 0x4, scoped, tag = 'scoped memory for reference_encoder_forward.5']
    #allocation4 [shape = 'u8[512]{0}', space=vmem, size = 0x400, scoped, tag = 'input window, operand 2, single buffered']
    #allocation5 [shape = 's32[1]{0}', space=sflag, size = 0x4, scoped, tag = 'scoped memory for reference_encoder_forward.5']
    #allocation6 [shape = 'u8[512]{0}', space=vmem, size = 0x400, scoped, tag = 'input window, operand 3, single buffered']
    %9 = vsyncpa [#allocation3], 0
    %10 = vsyncpa [#allocation5], 0
    // Predicated region
    $region2: #{reference_encoder_forward.5} parent=1 // pred_check
      _
    $region3: #{reference_encoder_forward.5} parent=1 // pred_check_branch
      %12 = sbr.rel (0) target = $region5
    $region4: #{reference_encoder_forward.5} parent=1 // pred_region
      _
    $region5: #{reference_encoder_forward.5} parent=1 // pred_fallthru
      _
    // Predicated region
    $region6: #{reference_encoder_forward.5} parent=1 // pred_check
      _
    $region7: #{reference_encoder_forward.5} parent=1 // pred_check_branch
      %14 = sbr.rel (0) target = $region9
    $region8: #{reference_encoder_forward.5} parent=1 // pred_region
      %s16 = ssub.s32 128, 128
      %17 = vsyncadd [#allocation3], %s16
      %s18 = sshll.u32 [#allocation2], 4
      %s19 = int_to_ptr.vmem [resolvable:$true] %s18
      %24 = dma.hbm_to_vmem [thread:$0]  %s1, 128, %s19, [#allocation3], 64, 64, 4
    $region9: #{reference_encoder_forward.5} parent=1 // pred_fallthru
      _
    // Predicated region
    $region10: #{reference_encoder_forward.5} parent=1 // pred_check
      _
    $region11: #{reference_encoder_forward.5} parent=1 // pred_check_branch
      %26 = sbr.rel (0) target = $region13
    $region12: #{reference_encoder_forward.5} parent=1 // pred_region
      %s28 = ssub.s32 16, 16
      %29 = vsyncadd [#allocation5], %s28
      %s31 = sshll.u32 [#allocation4], 4
      %s32 = int_to_ptr.vmem [resolvable:$true] %s31
      %34 = dma.hbm_to_vmem [thread:$0]  %s2, 16, %s32, [#allocation5]
    $region13: #{reference_encoder_forward.5} parent=1 // pred_fallthru
      _
    // Predicated region
    $region14: #{reference_encoder_forward.5} parent=1 // pred_check
      _
    $region15: #{reference_encoder_forward.5} parent=1 // pred_check_branch
      %36 = sbr.rel (0) target = $region17
    $region16: #{reference_encoder_forward.5} parent=1 // pred_region
      %s38 = ssub.s32 16, 16
      %39 = vsyncadd [#allocation5], %s38
      %s41 = sshll.u32 [#allocation6], 4
      %s42 = int_to_ptr.vmem [resolvable:$true] %s41
      %44 = dma.hbm_to_vmem [thread:$0]  %s3, 16, %s42, [#allocation5]
    $region17: #{reference_encoder_forward.5} parent=1 // pred_fallthru
      _
    // Predicated region
    $region18: #{reference_encoder_forward.5} parent=1 // pred_check
      _
    $region19: #{reference_encoder_forward.5} parent=1 // pred_check_branch
      %46 = sbr.rel (0) target = $region21
    $region20: #{reference_encoder_forward.5} parent=1 // pred_region
      %47 = dma.done [#allocation3], 128
    $region21: #{reference_encoder_forward.5} parent=1 // pred_fallthru
      _
    // Predicated region
    $region22: #{reference_encoder_forward.5} parent=1 // pred_check
      _
    $region23: #{reference_encoder_forward.5} parent=1 // pred_check_branch
      %49 = sbr.rel (0) target = $region25
    $region24: #{reference_encoder_forward.5} parent=1 // pred_region
      %50 = dma.done [#allocation5], 16
    $region25: #{reference_encoder_forward.5} parent=1 // pred_fallthru
      _
    // Predicated region
    $region26: #{reference_encoder_forward.5} parent=1 // pred_check
      _
    $region27: #{reference_encoder_forward.5} parent=1 // pred_check_branch
      %52 = sbr.rel (0) target = $region29
    $region28: #{reference_encoder_forward.5} parent=1 // pred_region
      %53 = dma.done [#allocation5], 16
    $region29: #{reference_encoder_forward.5} parent=1 // pred_fallthru
      _
    %v55 = vld [vmem:[%s0] sm:$0xf]
    %v56 = vld [vmem:[%s0 + $0x4] sm:$0xf]
    %v57 = vld [vmem:[%s0 + $0x8] sm:$0xf]
    %v58 = vld [vmem:[%s0 + $0xc] sm:$0xf]
    %v59 = vld [vmem:[%s0 + $0x10] sm:$0xf]
    %v60 = vld [vmem:[%s0 + $0x14] sm:$0xf]
    %v61 = vld [vmem:[%s0 + $0x18] sm:$0xf]
    %v62 = vld [vmem:[%s0 + $0x1c] sm:$0xf]
    %v63 = vld [vmem:[%s0 + $0x20] sm:$0xf]
    %v64 = vld [vmem:[%s0 + $0x24] sm:$0xf]
    %v65 = vld [vmem:[%s0 + $0x28] sm:$0xf]
    %v66 = vld [vmem:[%s0 + $0x2c] sm:$0xf]
    %v67 = vld [vmem:[%s0 + $0x30] sm:$0xf]
    %v68 = vld [vmem:[%s0 + $0x34] sm:$0xf]
    %v69 = vld [vmem:[%s0 + $0x38] sm:$0xf]
    %v70 = vld [vmem:[%s0 + $0x3c] sm:$0xf]
    %v71 = vld [vmem:[%s0 + $0x40] sm:$0xf]
    %v72 = vld [vmem:[%s0 + $0x44] sm:$0xf]
    %v73 = vld [vmem:[%s0 + $0x48] sm:$0xf]
    %v74 = vld [vmem:[%s0 + $0x4c] sm:$0xf]
    %v75 = vld [vmem:[%s0 + $0x50] sm:$0xf]
    %v76 = vld [vmem:[%s0 + $0x54] sm:$0xf]
    %v77 = vld [vmem:[%s0 + $0x58] sm:$0xf]
    %v78 = vld [vmem:[%s0 + $0x5c] sm:$0xf]
    %v79 = vld [vmem:[%s0 + $0x60] sm:$0xf]
    %v80 = vld [vmem:[%s0 + $0x64] sm:$0xf]
    %v81 = vld [vmem:[%s0 + $0x68] sm:$0xf]
    %v82 = vld [vmem:[%s0 + $0x6c] sm:$0xf]
    %v83 = vld [vmem:[%s0 + $0x70] sm:$0xf]
    %v84 = vld [vmem:[%s0 + $0x74] sm:$0xf]
    %v85 = vld [vmem:[%s0 + $0x78] sm:$0xf]
    %v86 = vld [vmem:[%s0 + $0x7c] sm:$0xf]
    %v87 = vld [vmem:[#allocation2] sm:$0xf]
    %v88 = vld [vmem:[#allocation2 + $0x4] sm:$0x1]
    %v121 = vunpack.c.l.b16 %v55
    %v122 = vunpack.c.l.b16 %v56
    %v123 = vunpack.c.l.b16 %v57
    %v124 = vunpack.c.l.b16 %v58
    %v125 = vunpack.c.l.b16 %v59
    %v126 = vunpack.c.l.b16 %v60
    %v127 = vunpack.c.l.b16 %v61
    %v128 = vunpack.c.l.b16 %v62
    %v129 = vunpack.c.l.b16 %v63
    %v130 = vunpack.c.l.b16 %v64
    %v131 = vunpack.c.l.b16 %v65
    %v132 = vunpack.c.l.b16 %v66
    %v133 = vunpack.c.l.b16 %v67
    %v134 = vunpack.c.l.b16 %v68
    %v135 = vunpack.c.l.b16 %v69
    %v136 = vunpack.c.l.b16 %v70
    %v137 = vunpack.c.l.b16 %v71
    %v138 = vunpack.c.l.b16 %v72
    %v139 = vunpack.c.l.b16 %v73
    %v140 = vunpack.c.l.b16 %v74
    %v141 = vunpack.c.l.b16 %v75
    %v142 = vunpack.c.l.b16 %v76
    %v143 = vunpack.c.l.b16 %v77
    %v144 = vunpack.c.l.b16 %v78
    %v145 = vunpack.c.l.b16 %v79
    %v146 = vunpack.c.l.b16 %v80
    %v147 = vunpack.c.l.b16 %v81
    %v148 = vunpack.c.l.b16 %v82
    %v149 = vunpack.c.l.b16 %v83
    %v150 = vunpack.c.l.b16 %v84
    %v151 = vunpack.c.l.b16 %v85
    %v152 = vunpack.c.l.b16 %v86
    %v153 = vpack.c.b16 %v122, %v121
    %v154 = vpack.c.b16 %v124, %v123
    %v155 = vpack.c.b16 %v126, %v125
    %v156 = vpack.c.b16 %v128, %v127
    %v157 = vpack.c.b16 %v130, %v129
    %v158 = vpack.c.b16 %v132, %v131
    %v159 = vpack.c.b16 %v134, %v133
    %v160 = vpack.c.b16 %v136, %v135
    %v161 = vpack.c.b16 %v138, %v137
    %v162 = vpack.c.b16 %v140, %v139
    %v163 = vpack.c.b16 %v142, %v141
    %v164 = vpack.c.b16 %v144, %v143
    %v165 = vpack.c.b16 %v146, %v145
    %v166 = vpack.c.b16 %v148, %v147
    %v167 = vpack.c.b16 %v150, %v149
    %v168 = vpack.c.b16 %v152, %v151
    %v171 = vunpack.c.l.b16 %v87
    %v172 = vunpack.c.l.b16 %v88
    %v173 = vpack.c.b16 %v172, %v171
    %vm174 = vcmask 72704
    %v176 = vsel %vm174, %v153, 0
    %v179 = vsel %vm174, %v154, 0
    %v182 = vsel %vm174, %v155, 0
    %v185 = vsel %vm174, %v156, 0
    %v188 = vsel %vm174, %v157, 0
    %v191 = vsel %vm174, %v158, 0
    %v194 = vsel %vm174, %v159, 0
    %v197 = vsel %vm174, %v160, 0
    %v200 = vsel %vm174, %v161, 0
    %v203 = vsel %vm174, %v162, 0
    %v206 = vsel %vm174, %v163, 0
    %v209 = vsel %vm174, %v164, 0
    %v212 = vsel %vm174, %v165, 0
    %v215 = vsel %vm174, %v166, 0
    %v218 = vsel %vm174, %v167, 0
    %v221 = vsel %vm174, %v168, 0
    %vm223 = vcmask 1043456
    %vm224 = vcmask 1044480
    %v225 = vsel %vm223, 4294967295, 65535
    %v226 = vsel %vm224, %v225, 0
    %v228 = vand.u32 %v173, %v226
    %230 = vmatprep.subr.bf16.mxu0 0
    %231 = vmatpush1.bf16.msra.mxu0 %v228
    %232 = vmatprep.subr.bf16.mxu0 0
    %233 = vmatpush1.bf16.msra.mxu0 0
    %234 = vmatprep.subr.bf16.mxu0 0
    %235 = vmatpush1.bf16.msra.mxu0 0
    %236 = vmatprep.subr.bf16.mxu0 0
    %237 = vmatpush1.bf16.msra.mxu0 0
    %238 = vmatprep.subr.bf16.mxu0 0
    %239 = vmatpush1.bf16.msra.mxu0 0
    %240 = vmatprep.subr.bf16.mxu0 0
    %241 = vmatpush1.bf16.msra.mxu0 0
    %242 = vmatprep.subr.bf16.mxu0 0
    %243 = vmatpush1.bf16.msra.mxu0 0
    %244 = vmatprep.subr.bf16.mxu0 0
    %245 = vmatpush1.bf16.msra.mxu0 0
    %246 = vmatprep.subr.bf16.mxu0 0
    %247 = vmatpush1.bf16.msra.mxu0 0
    %248 = vmatprep.subr.bf16.mxu0 0
    %249 = vmatpush1.bf16.msra.mxu0 0
    %250 = vmatprep.subr.bf16.mxu0 0
    %251 = vmatpush1.bf16.msra.mxu0 0
    %252 = vmatprep.subr.bf16.mxu0 0
    %253 = vmatpush1.bf16.msra.mxu0 0
    %254 = vmatprep.subr.bf16.mxu0 0
    %255 = vmatpush1.bf16.msra.mxu0 0
    %256 = vmatprep.subr.bf16.mxu0 0
    %257 = vmatpush1.bf16.msra.mxu0 0
    %258 = vmatprep.subr.bf16.mxu0 0
    %259 = vmatpush1.bf16.msra.mxu0 0
    %260 = vmatprep.subr.bf16.mxu0 0
    %261 = vmatpush1.bf16.msra.mxu0 0
    %262 = vmatprep.mubr.bf16.mxu0 0
    %263 = vmatmul.mubr.bf16.gmra.mrb[0].mxu0 %v176
    %v264 = vpop.f32.mrb[0].mxu0
    %v265 = vadd.f32 0.0, %v264
    %v266 = vpop.f32.mrb[0].mxu0
    %v267 = vpop.f32.mrb[0].mxu0
    %v268 = vadd.f32 0.0, %v267
    %v269 = vpop.f32.mrb[0].mxu0
    %270 = vmatprep.mubr.bf16.mxu0 0
    %271 = vmatmul.mubr.bf16.gmra.mrb[0].mxu0 %v179
    %v272 = vpop.f32.mrb[0].mxu0
    %v273 = vadd.f32 0.0, %v272
    %v274 = vpop.f32.mrb[0].mxu0
    %v275 = vpop.f32.mrb[0].mxu0
    %v276 = vadd.f32 0.0, %v275
    %v277 = vpop.f32.mrb[0].mxu0
    %278 = vmatprep.mubr.bf16.mxu0 0
    %279 = vmatmul.mubr.bf16.gmra.mrb[0].mxu0 %v182
    %v280 = vpop.f32.mrb[0].mxu0
    %v281 = vadd.f32 0.0, %v280
    %v282 = vpop.f32.mrb[0].mxu0
    %v283 = vpop.f32.mrb[0].mxu0
    %v284 = vadd.f32 0.0, %v283
    %v285 = vpop.f32.mrb[0].mxu0
    %286 = vmatprep.mubr.bf16.mxu0 0
    %287 = vmatmul.mubr.bf16.gmra.mrb[0].mxu0 %v185
    %v288 = vpop.f32.mrb[0].mxu0
    %v289 = vadd.f32 0.0, %v288
    %v290 = vpop.f32.mrb[0].mxu0
    %v291 = vpop.f32.mrb[0].mxu0
    %v292 = vadd.f32 0.0, %v291
    %v293 = vpop.f32.mrb[0].mxu0
    %294 = vmatprep.mubr.bf16.mxu0 0
    %295 = vmatmul.mubr.bf16.gmra.mrb[0].mxu0 %v188
    %v296 = vpop.f32.mrb[0].mxu0
    %v297 = vadd.f32 0.0, %v296
    %v298 = vpop.f32.mrb[0].mxu0
    %v299 = vpop.f32.mrb[0].mxu0
    %v300 = vadd.f32 0.0, %v299
    %v301 = vpop.f32.mrb[0].mxu0
    %302 = vmatprep.mubr.bf16.mxu0 0
    %303 = vmatmul.mubr.bf16.gmra.mrb[0].mxu0 %v191
    %v304 = vpop.f32.mrb[0].mxu0
    %v305 = vadd.f32 0.0, %v304
    %v306 = vpop.f32.mrb[0].mxu0
    %v307 = vpop.f32.mrb[0].mxu0
    %v308 = vadd.f32 0.0, %v307
    %v309 = vpop.f32.mrb[0].mxu0
    %310 = vmatprep.mubr.bf16.mxu0 0
    %311 = vmatmul.mubr.bf16.gmra.mrb[0].mxu0 %v194
    %v312 = vpop.f32.mrb[0].mxu0
    %v313 = vadd.f32 0.0, %v312
    %v314 = vpop.f32.mrb[0].mxu0
    %v315 = vpop.f32.mrb[0].mxu0
    %v316 = vadd.f32 0.0, %v315
    %v317 = vpop.f32.mrb[0].mxu0
    %318 = vmatprep.mubr.bf16.mxu0 0
    %319 = vmatmul.mubr.bf16.gmra.mrb[0].mxu0 %v197
    %v320 = vpop.f32.mrb[0].mxu0
    %v321 = vadd.f32 0.0, %v320
    %v322 = vpop.f32.mrb[0].mxu0
    %v323 = vpop.f32.mrb[0].mxu0
    %v324 = vadd.f32 0.0, %v323
    %v325 = vpop.f32.mrb[0].mxu0
    %326 = vmatprep.mubr.bf16.mxu0 0
    %327 = vmatmul.mubr.bf16.gmra.mrb[0].mxu0 %v200
    %v328 = vpop.f32.mrb[0].mxu0
    %v329 = vadd.f32 0.0, %v328
    %v330 = vpop.f32.mrb[0].mxu0
    %v331 = vpop.f32.mrb[0].mxu0
    %v332 = vadd.f32 0.0, %v331
    %v333 = vpop.f32.mrb[0].mxu0
    %334 = vmatprep.mubr.bf16.mxu0 0
    %335 = vmatmul.mubr.bf16.gmra.mrb[0].mxu0 %v203
    %v336 = vpop.f32.mrb[0].mxu0
    %v337 = vadd.f32 0.0, %v336
    %v338 = vpop.f32.mrb[0].mxu0
    %v339 = vpop.f32.mrb[0].mxu0
    %v340 = vadd.f32 0.0, %v339
    %v341 = vpop.f32.mrb[0].mxu0
    %342 = vmatprep.mubr.bf16.mxu0 0
    %343 = vmatmul.mubr.bf16.gmra.mrb[0].mxu0 %v206
    %v344 = vpop.f32.mrb[0].mxu0
    %v345 = vadd.f32 0.0, %v344
    %v346 = vpop.f32.mrb[0].mxu0
    %v347 = vpop.f32.mrb[0].mxu0
    %v348 = vadd.f32 0.0, %v347
    %v349 = vpop.f32.mrb[0].mxu0
    %350 = vmatprep.mubr.bf16.mxu0 0
    %351 = vmatmul.mubr.bf16.gmra.mrb[0].mxu0 %v209
    %v352 = vpop.f32.mrb[0].mxu0
    %v353 = vadd.f32 0.0, %v352
    %v354 = vpop.f32.mrb[0].mxu0
    %v355 = vpop.f32.mrb[0].mxu0
    %v356 = vadd.f32 0.0, %v355
    %v357 = vpop.f32.mrb[0].mxu0
    %358 = vmatprep.mubr.bf16.mxu0 0
    %359 = vmatmul.mubr.bf16.gmra.mrb[0].mxu0 %v212
    %v360 = vpop.f32.mrb[0].mxu0
    %v361 = vadd.f32 0.0, %v360
    %v362 = vpop.f32.mrb[0].mxu0
    %v363 = vpop.f32.mrb[0].mxu0
    %v364 = vadd.f32 0.0, %v363
    %v365 = vpop.f32.mrb[0].mxu0
    %366 = vmatprep.mubr.bf16.mxu0 0
    %367 = vmatmul.mubr.bf16.gmra.mrb[0].mxu0 %v215
    %v368 = vpop.f32.mrb[0].mxu0
    %v369 = vadd.f32 0.0, %v368
    %v370 = vpop.f32.mrb[0].mxu0
    %v371 = vpop.f32.mrb[0].mxu0
    %v372 = vadd.f32 0.0, %v371
    %v373 = vpop.f32.mrb[0].mxu0
    %374 = vmatprep.mubr.bf16.mxu0 0
    %375 = vmatmul.mubr.bf16.gmra.mrb[0].mxu0 %v218
    %v376 = vpop.f32.mrb[0].mxu0
    %v377 = vadd.f32 0.0, %v376
    %v378 = vpop.f32.mrb[0].mxu0
    %v379 = vpop.f32.mrb[0].mxu0
    %v380 = vadd.f32 0.0, %v379
    %v381 = vpop.f32.mrb[0].mxu0
    %382 = vmatprep.mubr.bf16.mxu0 0
    %383 = vmatmul.mubr.bf16.gmra.mrb[0].mxu0 %v221
    %v384 = vpop.f32.mrb[0].mxu0
    %v385 = vadd.f32 0.0, %v384
    %v386 = vpop.f32.mrb[0].mxu0
    %v387 = vpop.f32.mrb[0].mxu0
    %v388 = vadd.f32 0.0, %v387
    %v389 = vpop.f32.mrb[0].mxu0
    %390 = vdwg.mxu0
    %v391 = vld [vmem:[#allocation4] sm:$0x1]
    %v393 = vlaneseq
    %v394 = vshrl.u32 %v393, 7
    %v395 = vsub.s32 0, %v394
    %v396 = vrot.slane %v391, %v395
    %v398 = vmul.f32 %v265, %v396
    %v399 = vmul.f32 %v268, %v396
    %v400 = vmul.f32 %v273, %v396
    %v401 = vmul.f32 %v276, %v396
    %v402 = vmul.f32 %v281, %v396
    %v403 = vmul.f32 %v284, %v396
    %v404 = vmul.f32 %v289, %v396
    %v405 = vmul.f32 %v292, %v396
    %v406 = vmul.f32 %v297, %v396
    %v407 = vmul.f32 %v300, %v396
    %v408 = vmul.f32 %v305, %v396
    %v409 = vmul.f32 %v308, %v396
    %v410 = vmul.f32 %v313, %v396
    %v411 = vmul.f32 %v316, %v396
    %v412 = vmul.f32 %v321, %v396
    %v413 = vmul.f32 %v324, %v396
    %v414 = vmul.f32 %v329, %v396
    %v415 = vmul.f32 %v332, %v396
    %v416 = vmul.f32 %v337, %v396
    %v417 = vmul.f32 %v340, %v396
    %v418 = vmul.f32 %v345, %v396
    %v419 = vmul.f32 %v348, %v396
    %v420 = vmul.f32 %v353, %v396
    %v421 = vmul.f32 %v356, %v396
    %v422 = vmul.f32 %v361, %v396
    %v423 = vmul.f32 %v364, %v396
    %v424 = vmul.f32 %v369, %v396
    %v425 = vmul.f32 %v372, %v396
    %v426 = vmul.f32 %v377, %v396
    %v427 = vmul.f32 %v380, %v396
    %v428 = vmul.f32 %v385, %v396
    %v429 = vmul.f32 %v388, %v396
    %v430 = vld [vmem:[#allocation6] sm:$0x1]
    %v432 = vlaneseq
    %v433 = vshrl.u32 %v432, 7
    %v434 = vsub.s32 0, %v433
    %v435 = vrot.slane %v430, %v434
    %v437 = vadd.f32 %v398, %v435
    %v438 = vadd.f32 %v399, %v435
    %v439 = vadd.f32 %v400, %v435
    %v440 = vadd.f32 %v401, %v435
    %v441 = vadd.f32 %v402, %v435
    %v442 = vadd.f32 %v403, %v435
    %v443 = vadd.f32 %v404, %v435
    %v444 = vadd.f32 %v405, %v435
    %v445 = vadd.f32 %v406, %v435
    %v446 = vadd.f32 %v407, %v435
    %v447 = vadd.f32 %v408, %v435
    %v448 = vadd.f32 %v409, %v435
    %v449 = vadd.f32 %v410, %v435
    %v450 = vadd.f32 %v411, %v435
    %v451 = vadd.f32 %v412, %v435
    %v452 = vadd.f32 %v413, %v435
    %v453 = vadd.f32 %v414, %v435
    %v454 = vadd.f32 %v415, %v435
    %v455 = vadd.f32 %v416, %v435
    %v456 = vadd.f32 %v417, %v435
    %v457 = vadd.f32 %v418, %v435
    %v458 = vadd.f32 %v419, %v435
    %v459 = vadd.f32 %v420, %v435
    %v460 = vadd.f32 %v421, %v435
    %v461 = vadd.f32 %v422, %v435
    %v462 = vadd.f32 %v423, %v435
    %v463 = vadd.f32 %v424, %v435
    %v464 = vadd.f32 %v425, %v435
    %v465 = vadd.f32 %v426, %v435
    %v466 = vadd.f32 %v427, %v435
    %v467 = vadd.f32 %v428, %v435
    %v468 = vadd.f32 %v429, %v435
    %v469 = vmax.f32 %v437, 0.0
    %v470 = vmax.f32 %v438, 0.0
    %v471 = vmax.f32 %v439, 0.0
    %v472 = vmax.f32 %v440, 0.0
    %v473 = vmax.f32 %v441, 0.0
    %v474 = vmax.f32 %v442, 0.0
    %v475 = vmax.f32 %v443, 0.0
    %v476 = vmax.f32 %v444, 0.0
    %v477 = vmax.f32 %v445, 0.0
    %v478 = vmax.f32 %v446, 0.0
    %v479 = vmax.f32 %v447, 0.0
    %v480 = vmax.f32 %v448, 0.0
    %v481 = vmax.f32 %v449, 0.0
    %v482 = vmax.f32 %v450, 0.0
    %v483 = vmax.f32 %v451, 0.0
    %v484 = vmax.f32 %v452, 0.0
    %v485 = vmax.f32 %v453, 0.0
    %v486 = vmax.f32 %v454, 0.0
    %v487 = vmax.f32 %v455, 0.0
    %v488 = vmax.f32 %v456, 0.0
    %v489 = vmax.f32 %v457, 0.0
    %v490 = vmax.f32 %v458, 0.0
    %v491 = vmax.f32 %v459, 0.0
    %v492 = vmax.f32 %v460, 0.0
    %v493 = vmax.f32 %v461, 0.0
    %v494 = vmax.f32 %v462, 0.0
    %v495 = vmax.f32 %v463, 0.0
    %v496 = vmax.f32 %v464, 0.0
    %v497 = vmax.f32 %v465, 0.0
    %v498 = vmax.f32 %v466, 0.0
    %v499 = vmax.f32 %v467, 0.0
    %v500 = vmax.f32 %v468, 0.0
    %v501 = vpack.c.bf16 %v470, %v469
    %v502 = vpack.c.bf16 %v472, %v471
    %v503 = vpack.c.bf16 %v474, %v473
    %v504 = vpack.c.bf16 %v476, %v475
    %v505 = vpack.c.bf16 %v478, %v477
    %v506 = vpack.c.bf16 %v480, %v479
    %v507 = vpack.c.bf16 %v482, %v481
    %v508 = vpack.c.bf16 %v484, %v483
    %v509 = vpack.c.bf16 %v486, %v485
    %v510 = vpack.c.bf16 %v488, %v487
    %v511 = vpack.c.bf16 %v490, %v489
    %v512 = vpack.c.bf16 %v492, %v491
    %v513 = vpack.c.bf16 %v494, %v493
    %v514 = vpack.c.bf16 %v496, %v495
    %v515 = vpack.c.bf16 %v498, %v497
    %v516 = vpack.c.bf16 %v500, %v499
    %v533 = vunpack.c.l.b16 %v501
    %v534 = vunpack.c.h.b16 %v501
    %v535 = vunpack.c.l.b16 %v502
    %v536 = vunpack.c.h.b16 %v502
    %v537 = vunpack.c.l.b16 %v503
    %v538 = vunpack.c.h.b16 %v503
    %v539 = vunpack.c.l.b16 %v504
    %v540 = vunpack.c.h.b16 %v504
    %v541 = vunpack.c.l.b16 %v505
    %v542 = vunpack.c.h.b16 %v505
    %v543 = vunpack.c.l.b16 %v506
    %v544 = vunpack.c.h.b16 %v506
    %v545 = vunpack.c.l.b16 %v507
    %v546 = vunpack.c.h.b16 %v507
    %v547 = vunpack.c.l.b16 %v508
    %v548 = vunpack.c.h.b16 %v508
    %v549 = vunpack.c.l.b16 %v509
    %v550 = vunpack.c.h.b16 %v509
    %v551 = vunpack.c.l.b16 %v510
    %v552 = vunpack.c.h.b16 %v510
    %v553 = vunpack.c.l.b16 %v511
    %v554 = vunpack.c.h.b16 %v511
    %v555 = vunpack.c.l.b16 %v512
    %v556 = vunpack.c.h.b16 %v512
    %v557 = vunpack.c.l.b16 %v513
    %v558 = vunpack.c.h.b16 %v513
    %v559 = vunpack.c.l.b16 %v514
    %v560 = vunpack.c.h.b16 %v514
    %v561 = vunpack.c.l.b16 %v515
    %v562 = vunpack.c.h.b16 %v515
    %v563 = vunpack.c.l.b16 %v516
    %v564 = vunpack.c.h.b16 %v516
    %v565 = vpack.c.b16 %v533, %v533
    %v566 = vpack.c.b16 %v534, %v534
    %v567 = vpack.c.b16 %v535, %v535
    %v568 = vpack.c.b16 %v536, %v536
    %v569 = vpack.c.b16 %v537, %v537
    %v570 = vpack.c.b16 %v538, %v538
    %v571 = vpack.c.b16 %v539, %v539
    %v572 = vpack.c.b16 %v540, %v540
    %v573 = vpack.c.b16 %v541, %v541
    %v574 = vpack.c.b16 %v542, %v542
    %v575 = vpack.c.b16 %v543, %v543
    %v576 = vpack.c.b16 %v544, %v544
    %v577 = vpack.c.b16 %v545, %v545
    %v578 = vpack.c.b16 %v546, %v546
    %v579 = vpack.c.b16 %v547, %v547
    %v580 = vpack.c.b16 %v548, %v548
    %v581 = vpack.c.b16 %v549, %v549
    %v582 = vpack.c.b16 %v550, %v550
    %v583 = vpack.c.b16 %v551, %v551
    %v584 = vpack.c.b16 %v552, %v552
    %v585 = vpack.c.b16 %v553, %v553
    %v586 = vpack.c.b16 %v554, %v554
    %v587 = vpack.c.b16 %v555, %v555
    %v588 = vpack.c.b16 %v556, %v556
    %v589 = vpack.c.b16 %v557, %v557
    %v590 = vpack.c.b16 %v558, %v558
    %v591 = vpack.c.b16 %v559, %v559
    %v592 = vpack.c.b16 %v560, %v560
    %v593 = vpack.c.b16 %v561, %v561
    %v594 = vpack.c.b16 %v562, %v562
    %v595 = vpack.c.b16 %v563, %v563
    %v596 = vpack.c.b16 %v564, %v564
    %629 = vst [vmem:[%s4] sm:$0xf] %v565
    %630 = vst [vmem:[%s4 + $0x4] sm:$0xf] %v566
    %631 = vst [vmem:[%s4 + $0x8] sm:$0xf] %v567
    %632 = vst [vmem:[%s4 + $0xc] sm:$0xf] %v568
    %633 = vst [vmem:[%s4 + $0x10] sm:$0xf] %v569
    %634 = vst [vmem:[%s4 + $0x14] sm:$0xf] %v570
    %635 = vst [vmem:[%s4 + $0x18] sm:$0xf] %v571
    %636 = vst [vmem:[%s4 + $0x1c] sm:$0xf] %v572
    %637 = vst [vmem:[%s4 + $0x20] sm:$0xf] %v573
    %638 = vst [vmem:[%s4 + $0x24] sm:$0xf] %v574
    %639 = vst [vmem:[%s4 + $0x28] sm:$0xf] %v575
    %640 = vst [vmem:[%s4 + $0x2c] sm:$0xf] %v576
    %641 = vst [vmem:[%s4 + $0x30] sm:$0xf] %v577
    %642 = vst [vmem:[%s4 + $0x34] sm:$0xf] %v578
    %643 = vst [vmem:[%s4 + $0x38] sm:$0xf] %v579
    %644 = vst [vmem:[%s4 + $0x3c] sm:$0xf] %v580
    %645 = vst [vmem:[%s4 + $0x40] sm:$0xf] %v581
    %646 = vst [vmem:[%s4 + $0x44] sm:$0xf] %v582
    %647 = vst [vmem:[%s4 + $0x48] sm:$0xf] %v583
    %648 = vst [vmem:[%s4 + $0x4c] sm:$0xf] %v584
    %649 = vst [vmem:[%s4 + $0x50] sm:$0xf] %v585
    %650 = vst [vmem:[%s4 + $0x54] sm:$0xf] %v586
    %651 = vst [vmem:[%s4 + $0x58] sm:$0xf] %v587
    %652 = vst [vmem:[%s4 + $0x5c] sm:$0xf] %v588
    %653 = vst [vmem:[%s4 + $0x60] sm:$0xf] %v589
    %654 = vst [vmem:[%s4 + $0x64] sm:$0xf] %v590
    %655 = vst [vmem:[%s4 + $0x68] sm:$0xf] %v591
    %656 = vst [vmem:[%s4 + $0x6c] sm:$0xf] %v592
    %657 = vst [vmem:[%s4 + $0x70] sm:$0xf] %v593
    %658 = vst [vmem:[%s4 + $0x74] sm:$0xf] %v594
    %659 = vst [vmem:[%s4 + $0x78] sm:$0xf] %v595
    %660 = vst [vmem:[%s4 + $0x7c] sm:$0xf] %v596
    // Predicated region
    $region30: #{reference_encoder_forward.5} parent=1 // pred_check
      _
    $region31: #{reference_encoder_forward.5} parent=1 // pred_check_branch
      %662 = sbr.rel (0) target = $region33
    $region32: #{reference_encoder_forward.5} parent=1 // pred_region
      _
    $region33: #{reference_encoder_forward.5} parent=1 // pred_fallthru
      _
    // Predicated region
    $region34: #{reference_encoder_forward.5} parent=1 // pred_check
      _
    $region35: #{reference_encoder_forward.5} parent=1 // pred_check_branch
      %664 = sbr.rel (0) target = $region37
    $region36: #{reference_encoder_forward.5} parent=1 // pred_region
      _
    $region37: #{reference_encoder_forward.5} parent=1 // pred_fallthru
      _
    %665 = vsyncpa [#allocation3], 1
    %666 = vsyncpa [#allocation5], 1

// kernel: reference_encoder_forward.6
$region0: #{reference_encoder_forward.6}
  #allocation0 [shape = 'u32[]', space=smem, size = 0x4, offset = 0x4, fixed_abs, tag = 'smem constant byte address 0x4 - core index']
  #allocation1 [shape = 'u32[144,128]{1,0:T(1,128)}', space=vmem, size = 0x12000, scoped, tag = 'internal scratch']
  %s0 = inlined_call_operand.vmem [shape: bf16[64,1152], index: 0, kind: input, shape index: {}]
  %s1 = inlined_call_operand.vmem [shape: bf16[1152,128], index: 1, kind: input, shape index: {}]
  %s2 = inlined_call_operand.vmem [shape: f32[1,128], index: 2, kind: input, shape index: {}]
  %s3 = inlined_call_operand.vmem [shape: f32[1,128], index: 3, kind: input, shape index: {}]
  %s4 = inlined_call_operand.vmem [shape: bf16[64,128], index: 4, kind: output, shape index: {}]
  %s5 = sld [smem:[#allocation0]]
  $region26: #{reference_encoder_forward.6} parent=0
    _
  %s7 = ssub.s32 1, %s5
  %s8 = scalar_select 0, %s7, %s5
  // Predicated region
  $region2: #{reference_encoder_forward.6} parent=0 // pred_check
    _
  $region3: #{reference_encoder_forward.6} parent=0 // pred_check_branch
    %10 = sbr.rel (0) target = $region5
  $region4: #{reference_encoder_forward.6} parent=0 // pred_region
    _
  $region5: #{reference_encoder_forward.6} parent=0 // pred_fallthru
    _
  // Predicated region
  $region6: #{reference_encoder_forward.6} parent=0 // pred_check
    _
  $region7: #{reference_encoder_forward.6} parent=0 // pred_check_branch
    %12 = sbr.rel (0) target = $region9
  $region8: #{reference_encoder_forward.6} parent=0 // pred_region
    _
  $region9: #{reference_encoder_forward.6} parent=0 // pred_fallthru
    _
  // Predicated region
  $region10: #{reference_encoder_forward.6} parent=0 // pred_check
    _
  $region11: #{reference_encoder_forward.6} parent=0 // pred_check_branch
    %14 = sbr.rel (0) target = $region13
  $region12: #{reference_encoder_forward.6} parent=0 // pred_region
    _
  $region13: #{reference_encoder_forward.6} parent=0 // pred_fallthru
    _
  // Predicated region
  $region14: #{reference_encoder_forward.6} parent=0 // pred_check
    _
  $region15: #{reference_encoder_forward.6} parent=0 // pred_check_branch
    %16 = sbr.rel (0) target = $region17
  $region16: #{reference_encoder_forward.6} parent=0 // pred_region
    _
  $region17: #{reference_encoder_forward.6} parent=0 // pred_fallthru
    _
  %v18 = vld [vmem:[%s0] sm:$0xff]
  %v19 = vld [vmem:[%s0 + $0x8] sm:$0xff]
  %v20 = vld [vmem:[%s0 + $0x10] sm:$0xff]
  %v21 = vld [vmem:[%s0 + $0x18] sm:$0xff]
  %v22 = vld [vmem:[%s0 + $0x20] sm:$0xf]
  %v23 = vld [vmem:[%s0 + $0x24] sm:$0xff]
  %v24 = vld [vmem:[%s0 + $0x2c] sm:$0xff]
  %v25 = vld [vmem:[%s0 + $0x34] sm:$0xff]
  %v26 = vld [vmem:[%s0 + $0x3c] sm:$0xff]
  %v27 = vld [vmem:[%s0 + $0x44] sm:$0xf]
  %v28 = vld [vmem:[%s0 + $0x48] sm:$0xff]
  %v29 = vld [vmem:[%s0 + $0x50] sm:$0xff]
  %v30 = vld [vmem:[%s0 + $0x58] sm:$0xff]
  %v31 = vld [vmem:[%s0 + $0x60] sm:$0xff]
  %v32 = vld [vmem:[%s0 + $0x68] sm:$0xf]
  %v33 = vld [vmem:[%s0 + $0x6c] sm:$0xff]
  %v34 = vld [vmem:[%s0 + $0x74] sm:$0xff]
  %v35 = vld [vmem:[%s0 + $0x7c] sm:$0xff]
  %v36 = vld [vmem:[%s0 + $0x84] sm:$0xff]
  %v37 = vld [vmem:[%s0 + $0x8c] sm:$0xf]
  %v38 = vld [vmem:[%s0 + $0x90] sm:$0xff]
  %v39 = vld [vmem:[%s0 + $0x98] sm:$0xff]
  %v40 = vld [vmem:[%s0 + $0xa0] sm:$0xff]
  %v41 = vld [vmem:[%s0 + $0xa8] sm:$0xff]
  %v42 = vld [vmem:[%s0 + $0xb0] sm:$0xf]
  %v43 = vld [vmem:[%s0 + $0xb4] sm:$0xff]
  %v44 = vld [vmem:[%s0 + $0xbc] sm:$0xff]
  %v45 = vld [vmem:[%s0 + $0xc4] sm:$0xff]
  %v46 = vld [vmem:[%s0 + $0xcc] sm:$0xff]
  %v47 = vld [vmem:[%s0 + $0xd4] sm:$0xf]
  %v48 = vld [vmem:[%s0 + $0xd8] sm:$0xff]
  %v49 = vld [vmem:[%s0 + $0xe0] sm:$0xff]
  %v50 = vld [vmem:[%s0 + $0xe8] sm:$0xff]
  %v51 = vld [vmem:[%s0 + $0xf0] sm:$0xff]
  %v52 = vld [vmem:[%s0 + $0xf8] sm:$0xf]
  %v53 = vld [vmem:[%s0 + $0xfc] sm:$0xff]
  %v54 = vld [vmem:[%s0 + $0x104] sm:$0xff]
  %v55 = vld [vmem:[%s0 + $0x10c] sm:$0xff]
  %v56 = vld [vmem:[%s0 + $0x114] sm:$0xff]
  %v57 = vld [vmem:[%s0 + $0x11c] sm:$0xf]
  %v58 = vld [vmem:[%s1] sm:$0xf]
  %v59 = vld [vmem:[%s1 + $0x4] sm:$0xf]
  %v60 = vld [vmem:[%s1 + $0x8] sm:$0xf]
  %v61 = vld [vmem:[%s1 + $0xc] sm:$0xf]
  %v62 = vld [vmem:[%s1 + $0x10] sm:$0xf]
  %v63 = vld [vmem:[%s1 + $0x14] sm:$0xf]
  %v64 = vld [vmem:[%s1 + $0x18] sm:$0xf]
  %v65 = vld [vmem:[%s1 + $0x1c] sm:$0xf]
  %v66 = vld [vmem:[%s1 + $0x20] sm:$0xf]
  %v67 = vld [vmem:[%s1 + $0x24] sm:$0xf]
  %v68 = vld [vmem:[%s1 + $0x28] sm:$0xf]
  %v69 = vld [vmem:[%s1 + $0x2c] sm:$0xf]
  %v70 = vld [vmem:[%s1 + $0x30] sm:$0xf]
  %v71 = vld [vmem:[%s1 + $0x34] sm:$0xf]
  %v72 = vld [vmem:[%s1 + $0x38] sm:$0xf]
  %v73 = vld [vmem:[%s1 + $0x3c] sm:$0xf]
  %v74 = vld [vmem:[%s1 + $0x40] sm:$0xf]
  %v75 = vld [vmem:[%s1 + $0x44] sm:$0xf]
  %v76 = vld [vmem:[%s1 + $0x48] sm:$0xf]
  %v77 = vld [vmem:[%s1 + $0x4c] sm:$0xf]
  %v78 = vld [vmem:[%s1 + $0x50] sm:$0xf]
  %v79 = vld [vmem:[%s1 + $0x54] sm:$0xf]
  %v80 = vld [vmem:[%s1 + $0x58] sm:$0xf]
  %v81 = vld [vmem:[%s1 + $0x5c] sm:$0xf]
  %v82 = vld [vmem:[%s1 + $0x60] sm:$0xf]
  %v83 = vld [vmem:[%s1 + $0x64] sm:$0xf]
  %v84 = vld [vmem:[%s1 + $0x68] sm:$0xf]
  %v85 = vld [vmem:[%s1 + $0x6c] sm:$0xf]
  %v86 = vld [vmem:[%s1 + $0x70] sm:$0xf]
  %v87 = vld [vmem:[%s1 + $0x74] sm:$0xf]
  %v88 = vld [vmem:[%s1 + $0x78] sm:$0xf]
  %v89 = vld [vmem:[%s1 + $0x7c] sm:$0xf]
  %v90 = vld [vmem:[%s1 + $0x80] sm:$0xf]
  %v91 = vld [vmem:[%s1 + $0x84] sm:$0xf]
  %v92 = vld [vmem:[%s1 + $0x88] sm:$0xf]
  %v93 = vld [vmem:[%s1 + $0x8c] sm:$0xf]
  %v94 = vld [vmem:[%s1 + $0x90] sm:$0xf]
  %v95 = vld [vmem:[%s1 + $0x94] sm:$0xf]
  %v96 = vld [vmem:[%s1 + $0x98] sm:$0xf]
  %v97 = vld [vmem:[%s1 + $0x9c] sm:$0xf]
  %v98 = vld [vmem:[%s1 + $0xa0] sm:$0xf]
  %v99 = vld [vmem:[%s1 + $0xa4] sm:$0xf]
  %v100 = vld [vmem:[%s1 + $0xa8] sm:$0xf]
  %v101 = vld [vmem:[%s1 + $0xac] sm:$0xf]
  %v102 = vld [vmem:[%s1 + $0xb0] sm:$0xf]
  %v103 = vld [vmem:[%s1 + $0xb4] sm:$0xf]
  %v104 = vld [vmem:[%s1 + $0xb8] sm:$0xf]
  %v105 = vld [vmem:[%s1 + $0xbc] sm:$0xf]
  %v106 = vld [vmem:[%s1 + $0xc0] sm:$0xf]
  %v107 = vld [vmem:[%s1 + $0xc4] sm:$0xf]
  %v108 = vld [vmem:[%s1 + $0xc8] sm:$0xf]
  %v109 = vld [vmem:[%s1 + $0xcc] sm:$0xf]
  %v110 = vld [vmem:[%s1 + $0xd0] sm:$0xf]
  %v111 = vld [vmem:[%s1 + $0xd4] sm:$0xf]
  %v112 = vld [vmem:[%s1 + $0xd8] sm:$0xf]
  %v113 = vld [vmem:[%s1 + $0xdc] sm:$0xf]
  %v114 = vld [vmem:[%s1 + $0xe0] sm:$0xf]
  %v115 = vld [vmem:[%s1 + $0xe4] sm:$0xf]
  %v116 = vld [vmem:[%s1 + $0xe8] sm:$0xf]
  %v117 = vld [vmem:[%s1 + $0xec] sm:$0xf]
  %v118 = vld [vmem:[%s1 + $0xf0] sm:$0xf]
  %v119 = vld [vmem:[%s1 + $0xf4] sm:$0xf]
  %v120 = vld [vmem:[%s1 + $0xf8] sm:$0xf]
  %v121 = vld [vmem:[%s1 + $0xfc] sm:$0xf]
  %v122 = vld [vmem:[%s1 + $0x100] sm:$0xf]
  %v123 = vld [vmem:[%s1 + $0x104] sm:$0xf]
  %v124 = vld [vmem:[%s1 + $0x108] sm:$0xf]
  %v125 = vld [vmem:[%s1 + $0x10c] sm:$0xf]
  %v126 = vld [vmem:[%s1 + $0x110] sm:$0xf]
  %v127 = vld [vmem:[%s1 + $0x114] sm:$0xf]
  %v128 = vld [vmem:[%s1 + $0x118] sm:$0xf]
  %v129 = vld [vmem:[%s1 + $0x11c] sm:$0xf]
  %v130 = vld [vmem:[%s1 + $0x120] sm:$0xf]
  %v131 = vld [vmem:[%s1 + $0x124] sm:$0xf]
  %v132 = vld [vmem:[%s1 + $0x128] sm:$0xf]
  %v133 = vld [vmem:[%s1 + $0x12c] sm:$0xf]
  %v134 = vld [vmem:[%s1 + $0x130] sm:$0xf]
  %v135 = vld [vmem:[%s1 + $0x134] sm:$0xf]
  %v136 = vld [vmem:[%s1 + $0x138] sm:$0xf]
  %v137 = vld [vmem:[%s1 + $0x13c] sm:$0xf]
  %v138 = vld [vmem:[%s1 + $0x140] sm:$0xf]
  %v139 = vld [vmem:[%s1 + $0x144] sm:$0xf]
  %v140 = vld [vmem:[%s1 + $0x148] sm:$0xf]
  %v141 = vld [vmem:[%s1 + $0x14c] sm:$0xf]
  %v142 = vld [vmem:[%s1 + $0x150] sm:$0xf]
  %v143 = vld [vmem:[%s1 + $0x154] sm:$0xf]
  %v144 = vld [vmem:[%s1 + $0x158] sm:$0xf]
  %v145 = vld [vmem:[%s1 + $0x15c] sm:$0xf]
  %v146 = vld [vmem:[%s1 + $0x160] sm:$0xf]
  %v147 = vld [vmem:[%s1 + $0x164] sm:$0xf]
  %v148 = vld [vmem:[%s1 + $0x168] sm:$0xf]
  %v149 = vld [vmem:[%s1 + $0x16c] sm:$0xf]
  %v150 = vld [vmem:[%s1 + $0x170] sm:$0xf]
  %v151 = vld [vmem:[%s1 + $0x174] sm:$0xf]
  %v152 = vld [vmem:[%s1 + $0x178] sm:$0xf]
  %v153 = vld [vmem:[%s1 + $0x17c] sm:$0xf]
  %v154 = vld [vmem:[%s1 + $0x180] sm:$0xf]
  %v155 = vld [vmem:[%s1 + $0x184] sm:$0xf]
  %v156 = vld [vmem:[%s1 + $0x188] sm:$0xf]
  %v157 = vld [vmem:[%s1 + $0x18c] sm:$0xf]
  %v158 = vld [vmem:[%s1 + $0x190] sm:$0xf]
  %v159 = vld [vmem:[%s1 + $0x194] sm:$0xf]
  %v160 = vld [vmem:[%s1 + $0x198] sm:$0xf]
  %v161 = vld [vmem:[%s1 + $0x19c] sm:$0xf]
  %v162 = vld [vmem:[%s1 + $0x1a0] sm:$0xf]
  %v163 = vld [vmem:[%s1 + $0x1a4] sm:$0xf]
  %v164 = vld [vmem:[%s1 + $0x1a8] sm:$0xf]
  %v165 = vld [vmem:[%s1 + $0x1ac] sm:$0xf]
  %v166 = vld [vmem:[%s1 + $0x1b0] sm:$0xf]
  %v167 = vld [vmem:[%s1 + $0x1b4] sm:$0xf]
  %v168 = vld [vmem:[%s1 + $0x1b8] sm:$0xf]
  %v169 = vld [vmem:[%s1 + $0x1bc] sm:$0xf]
  %v170 = vld [vmem:[%s1 + $0x1c0] sm:$0xf]
  %v171 = vld [vmem:[%s1 + $0x1c4] sm:$0xf]
  %v172 = vld [vmem:[%s1 + $0x1c8] sm:$0xf]
  %v173 = vld [vmem:[%s1 + $0x1cc] sm:$0xf]
  %v174 = vld [vmem:[%s1 + $0x1d0] sm:$0xf]
  %v175 = vld [vmem:[%s1 + $0x1d4] sm:$0xf]
  %v176 = vld [vmem:[%s1 + $0x1d8] sm:$0xf]
  %v177 = vld [vmem:[%s1 + $0x1dc] sm:$0xf]
  %v178 = vld [vmem:[%s1 + $0x1e0] sm:$0xf]
  %v179 = vld [vmem:[%s1 + $0x1e4] sm:$0xf]
  %v180 = vld [vmem:[%s1 + $0x1e8] sm:$0xf]
  %v181 = vld [vmem:[%s1 + $0x1ec] sm:$0xf]
  %v182 = vld [vmem:[%s1 + $0x1f0] sm:$0xf]
  %v183 = vld [vmem:[%s1 + $0x1f4] sm:$0xf]
  %v184 = vld [vmem:[%s1 + $0x1f8] sm:$0xf]
  %v185 = vld [vmem:[%s1 + $0x1fc] sm:$0xf]
  %v186 = vld [vmem:[%s1 + $0x200] sm:$0xf]
  %v187 = vld [vmem:[%s1 + $0x204] sm:$0xf]
  %v188 = vld [vmem:[%s1 + $0x208] sm:$0xf]
  %v189 = vld [vmem:[%s1 + $0x20c] sm:$0xf]
  %v190 = vld [vmem:[%s1 + $0x210] sm:$0xf]
  %v191 = vld [vmem:[%s1 + $0x214] sm:$0xf]
  %v192 = vld [vmem:[%s1 + $0x218] sm:$0xf]
  %v193 = vld [vmem:[%s1 + $0x21c] sm:$0xf]
  %v194 = vld [vmem:[%s1 + $0x220] sm:$0xf]
  %v195 = vld [vmem:[%s1 + $0x224] sm:$0xf]
  %v196 = vld [vmem:[%s1 + $0x228] sm:$0xf]
  %v197 = vld [vmem:[%s1 + $0x22c] sm:$0xf]
  %v198 = vld [vmem:[%s1 + $0x230] sm:$0xf]
  %v199 = vld [vmem:[%s1 + $0x234] sm:$0xf]
  %v200 = vld [vmem:[%s1 + $0x238] sm:$0xf]
  %v201 = vld [vmem:[%s1 + $0x23c] sm:$0xf]
  %v242 = vunpack.c.l.b16 %v18
  %v243 = vunpack.c.h.b16 %v18
  %v244 = vunpack.c.l.b16 %v19
  %v245 = vunpack.c.h.b16 %v19
  %v246 = vunpack.c.l.b16 %v20
  %v247 = vunpack.c.h.b16 %v20
  %v248 = vunpack.c.l.b16 %v21
  %v249 = vunpack.c.h.b16 %v21
  %v250 = vunpack.c.l.b16 %v22
  %v251 = vunpack.c.l.b16 %v23
  %v252 = vunpack.c.h.b16 %v23
  %v253 = vunpack.c.l.b16 %v24
  %v254 = vunpack.c.h.b16 %v24
  %v255 = vunpack.c.l.b16 %v25
  %v256 = vunpack.c.h.b16 %v25
  %v257 = vunpack.c.l.b16 %v26
  %v258 = vunpack.c.h.b16 %v26
  %v259 = vunpack.c.l.b16 %v27
  %v260 = vunpack.c.l.b16 %v28
  %v261 = vunpack.c.h.b16 %v28
  %v262 = vunpack.c.l.b16 %v29
  %v263 = vunpack.c.h.b16 %v29
  %v264 = vunpack.c.l.b16 %v30
  %v265 = vunpack.c.h.b16 %v30
  %v266 = vunpack.c.l.b16 %v31
  %v267 = vunpack.c.h.b16 %v31
  %v268 = vunpack.c.l.b16 %v32
  %v269 = vunpack.c.l.b16 %v33
  %v270 = vunpack.c.h.b16 %v33
  %v271 = vunpack.c.l.b16 %v34
  %v272 = vunpack.c.h.b16 %v34
  %v273 = vunpack.c.l.b16 %v35
  %v274 = vunpack.c.h.b16 %v35
  %v275 = vunpack.c.l.b16 %v36
  %v276 = vunpack.c.h.b16 %v36
  %v277 = vunpack.c.l.b16 %v37
  %v278 = vunpack.c.l.b16 %v38
  %v279 = vunpack.c.h.b16 %v38
  %v280 = vunpack.c.l.b16 %v39
  %v281 = vunpack.c.h.b16 %v39
  %v282 = vunpack.c.l.b16 %v40
  %v283 = vunpack.c.h.b16 %v40
  %v284 = vunpack.c.l.b16 %v41
  %v285 = vunpack.c.h.b16 %v41
  %v286 = vunpack.c.l.b16 %v42
  %v287 = vunpack.c.l.b16 %v43
  %v288 = vunpack.c.h.b16 %v43
  %v289 = vunpack.c.l.b16 %v44
  %v290 = vunpack.c.h.b16 %v44
  %v291 = vunpack.c.l.b16 %v45
  %v292 = vunpack.c.h.b16 %v45
  %v293 = vunpack.c.l.b16 %v46
  %v294 = vunpack.c.h.b16 %v46
  %v295 = vunpack.c.l.b16 %v47
  %v296 = vunpack.c.l.b16 %v48
  %v297 = vunpack.c.h.b16 %v48
  %v298 = vunpack.c.l.b16 %v49
  %v299 = vunpack.c.h.b16 %v49
  %v300 = vunpack.c.l.b16 %v50
  %v301 = vunpack.c.h.b16 %v50
  %v302 = vunpack.c.l.b16 %v51
  %v303 = vunpack.c.h.b16 %v51
  %v304 = vunpack.c.l.b16 %v52
  %v305 = vunpack.c.l.b16 %v53
  %v306 = vunpack.c.h.b16 %v53
  %v307 = vunpack.c.l.b16 %v54
  %v308 = vunpack.c.h.b16 %v54
  %v309 = vunpack.c.l.b16 %v55
  %v310 = vunpack.c.h.b16 %v55
  %v311 = vunpack.c.l.b16 %v56
  %v312 = vunpack.c.h.b16 %v56
  %v313 = vunpack.c.l.b16 %v57
  %v314 = vpack.c.b16 %v251, %v242
  %v315 = vpack.c.b16 %v252, %v243
  %v316 = vpack.c.b16 %v253, %v244
  %v317 = vpack.c.b16 %v254, %v245
  %v318 = vpack.c.b16 %v255, %v246
  %v319 = vpack.c.b16 %v256, %v247
  %v320 = vpack.c.b16 %v257, %v248
  %v321 = vpack.c.b16 %v258, %v249
  %v322 = vpack.c.b16 %v259, %v250
  %v323 = vpack.c.b16 %v269, %v260
  %v324 = vpack.c.b16 %v270, %v261
  %v325 = vpack.c.b16 %v271, %v262
  %v326 = vpack.c.b16 %v272, %v263
  %v327 = vpack.c.b16 %v273, %v264
  %v328 = vpack.c.b16 %v274, %v265
  %v329 = vpack.c.b16 %v275, %v266
  %v330 = vpack.c.b16 %v276, %v267
  %v331 = vpack.c.b16 %v277, %v268
  %v332 = vpack.c.b16 %v287, %v278
  %v333 = vpack.c.b16 %v288, %v279
  %v334 = vpack.c.b16 %v289, %v280
  %v335 = vpack.c.b16 %v290, %v281
  %v336 = vpack.c.b16 %v291, %v282
  %v337 = vpack.c.b16 %v292, %v283
  %v338 = vpack.c.b16 %v293, %v284
  %v339 = vpack.c.b16 %v294, %v285
  %v340 = vpack.c.b16 %v295, %v286
  %v341 = vpack.c.b16 %v305, %v296
  %v342 = vpack.c.b16 %v306, %v297
  %v343 = vpack.c.b16 %v307, %v298
  %v344 = vpack.c.b16 %v308, %v299
  %v345 = vpack.c.b16 %v309, %v300
  %v346 = vpack.c.b16 %v310, %v301
  %v347 = vpack.c.b16 %v311, %v302
  %v348 = vpack.c.b16 %v312, %v303
  %v349 = vpack.c.b16 %v313, %v304
  %v530 = vunpack.c.l.b16 %v58
  %v531 = vunpack.c.l.b16 %v59
  %v532 = vunpack.c.l.b16 %v60
  %v533 = vunpack.c.l.b16 %v61
  %v534 = vunpack.c.l.b16 %v62
  %v535 = vunpack.c.l.b16 %v63
  %v536 = vunpack.c.l.b16 %v64
  %v537 = vunpack.c.l.b16 %v65
  %v538 = vunpack.c.l.b16 %v66
  %v539 = vunpack.c.l.b16 %v67
  %v540 = vunpack.c.l.b16 %v68
  %v541 = vunpack.c.l.b16 %v69
  %v542 = vunpack.c.l.b16 %v70
  %v543 = vunpack.c.l.b16 %v71
  %v544 = vunpack.c.l.b16 %v72
  %v545 = vunpack.c.l.b16 %v73
  %v546 = vunpack.c.l.b16 %v74
  %v547 = vunpack.c.l.b16 %v75
  %v548 = vunpack.c.l.b16 %v76
  %v549 = vunpack.c.l.b16 %v77
  %v550 = vunpack.c.l.b16 %v78
  %v551 = vunpack.c.l.b16 %v79
  %v552 = vunpack.c.l.b16 %v80
  %v553 = vunpack.c.l.b16 %v81
  %v554 = vunpack.c.l.b16 %v82
  %v555 = vunpack.c.l.b16 %v83
  %v556 = vunpack.c.l.b16 %v84
  %v557 = vunpack.c.l.b16 %v85
  %v558 = vunpack.c.l.b16 %v86
  %v559 = vunpack.c.l.b16 %v87
  %v560 = vunpack.c.l.b16 %v88
  %v561 = vunpack.c.l.b16 %v89
  %v562 = vunpack.c.l.b16 %v90
  %v563 = vunpack.c.l.b16 %v91
  %v564 = vunpack.c.l.b16 %v92
  %v565 = vunpack.c.l.b16 %v93
  %v566 = vunpack.c.l.b16 %v94
  %v567 = vunpack.c.l.b16 %v95
  %v568 = vunpack.c.l.b16 %v96
  %v569 = vunpack.c.l.b16 %v97
  %v570 = vunpack.c.l.b16 %v98
  %v571 = vunpack.c.l.b16 %v99
  %v572 = vunpack.c.l.b16 %v100
  %v573 = vunpack.c.l.b16 %v101
  %v574 = vunpack.c.l.b16 %v102
  %v575 = vunpack.c.l.b16 %v103
  %v576 = vunpack.c.l.b16 %v104
  %v577 = vunpack.c.l.b16 %v105
  %v578 = vunpack.c.l.b16 %v106
  %v579 = vunpack.c.l.b16 %v107
  %v580 = vunpack.c.l.b16 %v108
  %v581 = vunpack.c.l.b16 %v109
  %v582 = vunpack.c.l.b16 %v110
  %v583 = vunpack.c.l.b16 %v111
  %v584 = vunpack.c.l.b16 %v112
  %v585 = vunpack.c.l.b16 %v113
  %v586 = vunpack.c.l.b16 %v114
  %v587 = vunpack.c.l.b16 %v115
  %v588 = vunpack.c.l.b16 %v116
  %v589 = vunpack.c.l.b16 %v117
  %v590 = vunpack.c.l.b16 %v118
  %v591 = vunpack.c.l.b16 %v119
  %v592 = vunpack.c.l.b16 %v120
  %v593 = vunpack.c.l.b16 %v121
  %v594 = vunpack.c.l.b16 %v122
  %v595 = vunpack.c.l.b16 %v123
  %v596 = vunpack.c.l.b16 %v124
  %v597 = vunpack.c.l.b16 %v125
  %v598 = vunpack.c.l.b16 %v126
  %v599 = vunpack.c.l.b16 %v127
  %v600 = vunpack.c.l.b16 %v128
  %v601 = vunpack.c.l.b16 %v129
  %v602 = vunpack.c.l.b16 %v130
  %v603 = vunpack.c.l.b16 %v131
  %v604 = vunpack.c.l.b16 %v132
  %v605 = vunpack.c.l.b16 %v133
  %v606 = vunpack.c.l.b16 %v134
  %v607 = vunpack.c.l.b16 %v135
  %v608 = vunpack.c.l.b16 %v136
  %v609 = vunpack.c.l.b16 %v137
  %v610 = vunpack.c.l.b16 %v138
  %v611 = vunpack.c.l.b16 %v139
  %v612 = vunpack.c.l.b16 %v140
  %v613 = vunpack.c.l.b16 %v141
  %v614 = vunpack.c.l.b16 %v142
  %v615 = vunpack.c.l.b16 %v143
  %v616 = vunpack.c.l.b16 %v144
  %v617 = vunpack.c.l.b16 %v145
  %v618 = vunpack.c.l.b16 %v146
  %v619 = vunpack.c.l.b16 %v147
  %v620 = vunpack.c.l.b16 %v148
  %v621 = vunpack.c.l.b16 %v149
  %v622 = vunpack.c.l.b16 %v150
  %v623 = vunpack.c.l.b16 %v151
  %v624 = vunpack.c.l.b16 %v152
  %v625 = vunpack.c.l.b16 %v153
  %v626 = vunpack.c.l.b16 %v154
  %v627 = vunpack.c.l.b16 %v155
  %v628 = vunpack.c.l.b16 %v156
  %v629 = vunpack.c.l.b16 %v157
  %v630 = vunpack.c.l.b16 %v158
  %v631 = vunpack.c.l.b16 %v159
  %v632 = vunpack.c.l.b16 %v160
  %v633 = vunpack.c.l.b16 %v161
  %v634 = vunpack.c.l.b16 %v162
  %v635 = vunpack.c.l.b16 %v163
  %v636 = vunpack.c.l.b16 %v164
  %v637 = vunpack.c.l.b16 %v165
  %v638 = vunpack.c.l.b16 %v166
  %v639 = vunpack.c.l.b16 %v167
  %v640 = vunpack.c.l.b16 %v168
  %v641 = vunpack.c.l.b16 %v169
  %v642 = vunpack.c.l.b16 %v170
  %v643 = vunpack.c.l.b16 %v171
  %v644 = vunpack.c.l.b16 %v172
  %v645 = vunpack.c.l.b16 %v173
  %v646 = vunpack.c.l.b16 %v174
  %v647 = vunpack.c.l.b16 %v175
  %v648 = vunpack.c.l.b16 %v176
  %v649 = vunpack.c.l.b16 %v177
  %v650 = vunpack.c.l.b16 %v178
  %v651 = vunpack.c.l.b16 %v179
  %v652 = vunpack.c.l.b16 %v180
  %v653 = vunpack.c.l.b16 %v181
  %v654 = vunpack.c.l.b16 %v182
  %v655 = vunpack.c.l.b16 %v183
  %v656 = vunpack.c.l.b16 %v184
  %v657 = vunpack.c.l.b16 %v185
  %v658 = vunpack.c.l.b16 %v186
  %v659 = vunpack.c.l.b16 %v187
  %v660 = vunpack.c.l.b16 %v188
  %v661 = vunpack.c.l.b16 %v189
  %v662 = vunpack.c.l.b16 %v190
  %v663 = vunpack.c.l.b16 %v191
  %v664 = vunpack.c.l.b16 %v192
  %v665 = vunpack.c.l.b16 %v193
  %v666 = vunpack.c.l.b16 %v194
  %v667 = vunpack.c.l.b16 %v195
  %v668 = vunpack.c.l.b16 %v196
  %v669 = vunpack.c.l.b16 %v197
  %v670 = vunpack.c.l.b16 %v198
  %v671 = vunpack.c.l.b16 %v199
  %v672 = vunpack.c.l.b16 %v200
  %v673 = vunpack.c.l.b16 %v201
  %v674 = vpack.c.b16 %v531, %v530
  %v675 = vpack.c.b16 %v533, %v532
  %v676 = vpack.c.b16 %v535, %v534
  %v677 = vpack.c.b16 %v537, %v536
  %v678 = vpack.c.b16 %v539, %v538
  %v679 = vpack.c.b16 %v541, %v540
  %v680 = vpack.c.b16 %v543, %v542
  %v681 = vpack.c.b16 %v545, %v544
  %v682 = vpack.c.b16 %v547, %v546
  %v683 = vpack.c.b16 %v549, %v548
  %v684 = vpack.c.b16 %v551, %v550
  %v685 = vpack.c.b16 %v553, %v552
  %v686 = vpack.c.b16 %v555, %v554
  %v687 = vpack.c.b16 %v557, %v556
  %v688 = vpack.c.b16 %v559, %v558
  %v689 = vpack.c.b16 %v561, %v560
  %v690 = vpack.c.b16 %v563, %v562
  %v691 = vpack.c.b16 %v565, %v564
  %v692 = vpack.c.b16 %v567, %v566
  %v693 = vpack.c.b16 %v569, %v568
  %v694 = vpack.c.b16 %v571, %v570
  %v695 = vpack.c.b16 %v573, %v572
  %v696 = vpack.c.b16 %v575, %v574
  %v697 = vpack.c.b16 %v577, %v576
  %v698 = vpack.c.b16 %v579, %v578
  %v699 = vpack.c.b16 %v581, %v580
  %v700 = vpack.c.b16 %v583, %v582
  %v701 = vpack.c.b16 %v585, %v584
  %v702 = vpack.c.b16 %v587, %v586
  %v703 = vpack.c.b16 %v589, %v588
  %v704 = vpack.c.b16 %v591, %v590
  %v705 = vpack.c.b16 %v593, %v592
  %v706 = vpack.c.b16 %v595, %v594
  %v707 = vpack.c.b16 %v597, %v596
  %v708 = vpack.c.b16 %v599, %v598
  %v709 = vpack.c.b16 %v601, %v600
  %v710 = vpack.c.b16 %v603, %v602
  %v711 = vpack.c.b16 %v605, %v604
  %v712 = vpack.c.b16 %v607, %v606
  %v713 = vpack.c.b16 %v609, %v608
  %v714 = vpack.c.b16 %v611, %v610
  %v715 = vpack.c.b16 %v613, %v612
  %v716 = vpack.c.b16 %v615, %v614
  %v717 = vpack.c.b16 %v617, %v616
  %v718 = vpack.c.b16 %v619, %v618
  %v719 = vpack.c.b16 %v621, %v620
  %v720 = vpack.c.b16 %v623, %v622
  %v721 = vpack.c.b16 %v625, %v624
  %v722 = vpack.c.b16 %v627, %v626
  %v723 = vpack.c.b16 %v629, %v628
  %v724 = vpack.c.b16 %v631, %v630
  %v725 = vpack.c.b16 %v633, %v632
  %v726 = vpack.c.b16 %v635, %v634
  %v727 = vpack.c.b16 %v637, %v636
  %v728 = vpack.c.b16 %v639, %v638
  %v729 = vpack.c.b16 %v641, %v640
  %v730 = vpack.c.b16 %v643, %v642
  %v731 = vpack.c.b16 %v645, %v644
  %v732 = vpack.c.b16 %v647, %v646
  %v733 = vpack.c.b16 %v649, %v648
  %v734 = vpack.c.b16 %v651, %v650
  %v735 = vpack.c.b16 %v653, %v652
  %v736 = vpack.c.b16 %v655, %v654
  %v737 = vpack.c.b16 %v657, %v656
  %v738 = vpack.c.b16 %v659, %v658
  %v739 = vpack.c.b16 %v661, %v660
  %v740 = vpack.c.b16 %v663, %v662
  %v741 = vpack.c.b16 %v665, %v664
  %v742 = vpack.c.b16 %v667, %v666
  %v743 = vpack.c.b16 %v669, %v668
  %v744 = vpack.c.b16 %v671, %v670
  %v745 = vpack.c.b16 %v673, %v672
  %818 = vmatprep.subr.bf16.mxu0 0
  %819 = vmatpush1.bf16.msra.mxu0 %v674
  %820 = vmatprep.subr.bf16.mxu0 0
  %821 = vmatpush1.bf16.msra.mxu0 %v675
  %822 = vmatprep.subr.bf16.mxu0 0
  %823 = vmatpush1.bf16.msra.mxu0 %v676
  %824 = vmatprep.subr.bf16.mxu0 0
  %825 = vmatpush1.bf16.msra.mxu0 %v677
  %826 = vmatprep.subr.bf16.mxu0 0
  %827 = vmatpush1.bf16.msra.mxu0 %v678
  %828 = vmatprep.subr.bf16.mxu0 0
  %829 = vmatpush1.bf16.msra.mxu0 %v679
  %830 = vmatprep.subr.bf16.mxu0 0
  %831 = vmatpush1.bf16.msra.mxu0 %v680
  %832 = vmatprep.subr.bf16.mxu0 0
  %833 = vmatpush1.bf16.msra.mxu0 %v681
  %834 = vmatprep.subr.bf16.mxu0 0
  %835 = vmatpush1.bf16.msra.mxu0 %v682
  %836 = vmatprep.subr.bf16.mxu0 0
  %837 = vmatpush1.bf16.msra.mxu0 %v683
  %838 = vmatprep.subr.bf16.mxu0 0
  %839 = vmatpush1.bf16.msra.mxu0 %v684
  %840 = vmatprep.subr.bf16.mxu0 0
  %841 = vmatpush1.bf16.msra.mxu0 %v685
  %842 = vmatprep.subr.bf16.mxu0 0
  %843 = vmatpush1.bf16.msra.mxu0 %v686
  %844 = vmatprep.subr.bf16.mxu0 0
  %845 = vmatpush1.bf16.msra.mxu0 %v687
  %846 = vmatprep.subr.bf16.mxu0 0
  %847 = vmatpush1.bf16.msra.mxu0 %v688
  %848 = vmatprep.subr.bf16.mxu0 0
  %849 = vmatpush1.bf16.msra.mxu0 %v689
  %850 = vmatprep.mubr.bf16.mxu0 %v315
  %851 = vmatmul.mubr.bf16.gmra.mrb[0].mxu0 %v314
  %v852 = vpop.f32.mrb[0].mxu0
  %v853 = vadd.f32 0.0, %v852
  %v854 = vpop.f32.mrb[0].mxu0
  %v855 = vpop.f32.mrb[0].mxu0
  %v856 = vadd.f32 0.0, %v855
  %v857 = vpop.f32.mrb[0].mxu0
  %858 = vmatprep.mubr.bf16.mxu0 %v324
  %859 = vmatmul.mubr.bf16.gmra.mrb[0].mxu0 %v323
  %v860 = vpop.f32.mrb[0].mxu0
  %v861 = vadd.f32 0.0, %v860
  %v862 = vpop.f32.mrb[0].mxu0
  %v863 = vpop.f32.mrb[0].mxu0
  %v864 = vadd.f32 0.0, %v863
  %v865 = vpop.f32.mrb[0].mxu0
  %866 = vmatprep.mubr.bf16.mxu0 %v333
  %867 = vmatmul.mubr.bf16.gmra.mrb[0].mxu0 %v332
  %v868 = vpop.f32.mrb[0].mxu0
  %v869 = vadd.f32 0.0, %v868
  %v870 = vpop.f32.mrb[0].mxu0
  %v871 = vpop.f32.mrb[0].mxu0
  %v872 = vadd.f32 0.0, %v871
  %v873 = vpop.f32.mrb[0].mxu0
  %874 = vmatprep.mubr.bf16.mxu0 %v342
  %875 = vmatmul.mubr.bf16.gmra.mrb[0].mxu0 %v341
  %v876 = vpop.f32.mrb[0].mxu0
  %v877 = vadd.f32 0.0, %v876
  %v878 = vpop.f32.mrb[0].mxu0
  %v879 = vpop.f32.mrb[0].mxu0
  %v880 = vadd.f32 0.0, %v879
  %v881 = vpop.f32.mrb[0].mxu0
  %882 = vdwg.mxu0
  %883 = vmatprep.subr.bf16.mxu0 0
  %884 = vmatpush1.bf16.msra.mxu0 %v690
  %885 = vmatprep.subr.bf16.mxu0 0
  %886 = vmatpush1.bf16.msra.mxu0 %v691
  %887 = vmatprep.subr.bf16.mxu0 0
  %888 = vmatpush1.bf16.msra.mxu0 %v692
  %889 = vmatprep.subr.bf16.mxu0 0
  %890 = vmatpush1.bf16.msra.mxu0 %v693
  %891 = vmatprep.subr.bf16.mxu0 0
  %892 = vmatpush1.bf16.msra.mxu0 %v694
  %893 = vmatprep.subr.bf16.mxu0 0
  %894 = vmatpush1.bf16.msra.mxu0 %v695
  %895 = vmatprep.subr.bf16.mxu0 0
  %896 = vmatpush1.bf16.msra.mxu0 %v696
  %897 = vmatprep.subr.bf16.mxu0 0
  %898 = vmatpush1.bf16.msra.mxu0 %v697
  %899 = vmatprep.subr.bf16.mxu0 0
  %900 = vmatpush1.bf16.msra.mxu0 %v698
  %901 = vmatprep.subr.bf16.mxu0 0
  %902 = vmatpush1.bf16.msra.mxu0 %v699
  %903 = vmatprep.subr.bf16.mxu0 0
  %904 = vmatpush1.bf16.msra.mxu0 %v700
  %905 = vmatprep.subr.bf16.mxu0 0
  %906 = vmatpush1.bf16.msra.mxu0 %v701
  %907 = vmatprep.subr.bf16.mxu0 0
  %908 = vmatpush1.bf16.msra.mxu0 %v702
  %909 = vmatprep.subr.bf16.mxu0 0
  %910 = vmatpush1.bf16.msra.mxu0 %v703
  %911 = vmatprep.subr.bf16.mxu0 0
  %912 = vmatpush1.bf16.msra.mxu0 %v704
  %913 = vmatprep.subr.bf16.mxu0 0
  %914 = vmatpush1.bf16.msra.mxu0 %v705
  %915 = vmatprep.mubr.bf16.mxu0 %v317
  %916 = vmatmul.mubr.bf16.gmra.mrb[0].mxu0 %v316
  %v917 = vpop.f32.mrb[0].mxu0
  %v918 = vadd.f32 %v853, %v917
  %v919 = vpop.f32.mrb[0].mxu0
  %v920 = vpop.f32.mrb[0].mxu0
  %v921 = vadd.f32 %v856, %v920
  %v922 = vpop.f32.mrb[0].mxu0
  %923 = vmatprep.mubr.bf16.mxu0 %v326
  %924 = vmatmul.mubr.bf16.gmra.mrb[0].mxu0 %v325
  %v925 = vpop.f32.mrb[0].mxu0
  %v926 = vadd.f32 %v861, %v925
  %v927 = vpop.f32.mrb[0].mxu0
  %v928 = vpop.f32.mrb[0].mxu0
  %v929 = vadd.f32 %v864, %v928
  %v930 = vpop.f32.mrb[0].mxu0
  %931 = vmatprep.mubr.bf16.mxu0 %v335
  %932 = vmatmul.mubr.bf16.gmra.mrb[0].mxu0 %v334
  %v933 = vpop.f32.mrb[0].mxu0
  %v934 = vadd.f32 %v869, %v933
  %v935 = vpop.f32.mrb[0].mxu0
  %v936 = vpop.f32.mrb[0].mxu0
  %v937 = vadd.f32 %v872, %v936
  %v938 = vpop.f32.mrb[0].mxu0
  %939 = vmatprep.mubr.bf16.mxu0 %v344
  %940 = vmatmul.mubr.bf16.gmra.mrb[0].mxu0 %v343
  %v941 = vpop.f32.mrb[0].mxu0
  %v942 = vadd.f32 %v877, %v941
  %v943 = vpop.f32.mrb[0].mxu0
  %v944 = vpop.f32.mrb[0].mxu0
  %v945 = vadd.f32 %v880, %v944
  %v946 = vpop.f32.mrb[0].mxu0
  %947 = vdwg.mxu0
  %948 = vmatprep.subr.bf16.mxu0 0
  %949 = vmatpush1.bf16.msra.mxu0 %v706
  %950 = vmatprep.subr.bf16.mxu0 0
  %951 = vmatpush1.bf16.msra.mxu0 %v707
  %952 = vmatprep.subr.bf16.mxu0 0
  %953 = vmatpush1.bf16.msra.mxu0 %v708
  %954 = vmatprep.subr.bf16.mxu0 0
  %955 = vmatpush1.bf16.msra.mxu0 %v709
  %956 = vmatprep.subr.bf16.mxu0 0
  %957 = vmatpush1.bf16.msra.mxu0 %v710
  %958 = vmatprep.subr.bf16.mxu0 0
  %959 = vmatpush1.bf16.msra.mxu0 %v711
  %960 = vmatprep.subr.bf16.mxu0 0
  %961 = vmatpush1.bf16.msra.mxu0 %v712
  %962 = vmatprep.subr.bf16.mxu0 0
  %963 = vmatpush1.bf16.msra.mxu0 %v713
  %964 = vmatprep.subr.bf16.mxu0 0
  %965 = vmatpush1.bf16.msra.mxu0 %v714
  %966 = vmatprep.subr.bf16.mxu0 0
  %967 = vmatpush1.bf16.msra.mxu0 %v715
  %968 = vmatprep.subr.bf16.mxu0 0
  %969 = vmatpush1.bf16.msra.mxu0 %v716
  %970 = vmatprep.subr.bf16.mxu0 0
  %971 = vmatpush1.bf16.msra.mxu0 %v717
  %972 = vmatprep.subr.bf16.mxu0 0
  %973 = vmatpush1.bf16.msra.mxu0 %v718
  %974 = vmatprep.subr.bf16.mxu0 0
  %975 = vmatpush1.bf16.msra.mxu0 %v719
  %976 = vmatprep.subr.bf16.mxu0 0
  %977 = vmatpush1.bf16.msra.mxu0 %v720
  %978 = vmatprep.subr.bf16.mxu0 0
  %979 = vmatpush1.bf16.msra.mxu0 %v721
  %980 = vmatprep.mubr.bf16.mxu0 %v319
  %981 = vmatmul.mubr.bf16.gmra.mrb[0].mxu0 %v318
  %v982 = vpop.f32.mrb[0].mxu0
  %v983 = vadd.f32 %v918, %v982
  %v984 = vpop.f32.mrb[0].mxu0
  %v985 = vpop.f32.mrb[0].mxu0
  %v986 = vadd.f32 %v921, %v985
  %v987 = vpop.f32.mrb[0].mxu0
  %988 = vmatprep.mubr.bf16.mxu0 %v328
  %989 = vmatmul.mubr.bf16.gmra.mrb[0].mxu0 %v327
  %v990 = vpop.f32.mrb[0].mxu0
  %v991 = vadd.f32 %v926, %v990
  %v992 = vpop.f32.mrb[0].mxu0
  %v993 = vpop.f32.mrb[0].mxu0
  %v994 = vadd.f32 %v929, %v993
  %v995 = vpop.f32.mrb[0].mxu0
  %996 = vmatprep.mubr.bf16.mxu0 %v337
  %997 = vmatmul.mubr.bf16.gmra.mrb[0].mxu0 %v336
  %v998 = vpop.f32.mrb[0].mxu0
  %v999 = vadd.f32 %v934, %v998
  %v1000 = vpop.f32.mrb[0].mxu0
  %v1001 = vpop.f32.mrb[0].mxu0
  %v1002 = vadd.f32 %v937, %v1001
  %v1003 = vpop.f32.mrb[0].mxu0
  %1004 = vmatprep.mubr.bf16.mxu0 %v346
  %1005 = vmatmul.mubr.bf16.gmra.mrb[0].mxu0 %v345
  %v1006 = vpop.f32.mrb[0].mxu0
  %v1007 = vadd.f32 %v942, %v1006
  %v1008 = vpop.f32.mrb[0].mxu0
  %v1009 = vpop.f32.mrb[0].mxu0
  %v1010 = vadd.f32 %v945, %v1009
  %v1011 = vpop.f32.mrb[0].mxu0
  %1012 = vdwg.mxu0
  %1013 = vmatprep.subr.bf16.mxu0 0
  %1014 = vmatpush1.bf16.msra.mxu0 %v722
  %1015 = vmatprep.subr.bf16.mxu0 0
  %1016 = vmatpush1.bf16.msra.mxu0 %v723
  %1017 = vmatprep.subr.bf16.mxu0 0
  %1018 = vmatpush1.bf16.msra.mxu0 %v724
  %1019 = vmatprep.subr.bf16.mxu0 0
  %1020 = vmatpush1.bf16.msra.mxu0 %v725
  %1021 = vmatprep.subr.bf16.mxu0 0
  %1022 = vmatpush1.bf16.msra.mxu0 %v726
  %1023 = vmatprep.subr.bf16.mxu0 0
  %1024 = vmatpush1.bf16.msra.mxu0 %v727
  %1025 = vmatprep.subr.bf16.mxu0 0
  %1026 = vmatpush1.bf16.msra.mxu0 %v728
  %1027 = vmatprep.subr.bf16.mxu0 0
  %1028 = vmatpush1.bf16.msra.mxu0 %v729
  %1029 = vmatprep.subr.bf16.mxu0 0
  %1030 = vmatpush1.bf16.msra.mxu0 %v730
  %1031 = vmatprep.subr.bf16.mxu0 0
  %1032 = vmatpush1.bf16.msra.mxu0 %v731
  %1033 = vmatprep.subr.bf16.mxu0 0
  %1034 = vmatpush1.bf16.msra.mxu0 %v732
  %1035 = vmatprep.subr.bf16.mxu0 0
  %1036 = vmatpush1.bf16.msra.mxu0 %v733
  %1037 = vmatprep.subr.bf16.mxu0 0
  %1038 = vmatpush1.bf16.msra.mxu0 %v734
  %1039 = vmatprep.subr.bf16.mxu0 0
  %1040 = vmatpush1.bf16.msra.mxu0 %v735
  %1041 = vmatprep.subr.bf16.mxu0 0
  %1042 = vmatpush1.bf16.msra.mxu0 %v736
  %1043 = vmatprep.subr.bf16.mxu0 0
  %1044 = vmatpush1.bf16.msra.mxu0 %v737
  %1045 = vmatprep.mubr.bf16.mxu0 %v321
  %1046 = vmatmul.mubr.bf16.gmra.mrb[0].mxu0 %v320
  %v1047 = vpop.f32.mrb[0].mxu0
  %v1048 = vadd.f32 %v983, %v1047
  %v1049 = vpop.f32.mrb[0].mxu0
  %v1050 = vpop.f32.mrb[0].mxu0
  %v1051 = vadd.f32 %v986, %v1050
  %v1052 = vpop.f32.mrb[0].mxu0
  %1053 = vmatprep.mubr.bf16.mxu0 %v330
  %1054 = vmatmul.mubr.bf16.gmra.mrb[0].mxu0 %v329
  %v1055 = vpop.f32.mrb[0].mxu0
  %v1056 = vadd.f32 %v991, %v1055
  %v1057 = vpop.f32.mrb[0].mxu0
  %v1058 = vpop.f32.mrb[0].mxu0
  %v1059 = vadd.f32 %v994, %v1058
  %v1060 = vpop.f32.mrb[0].mxu0
  %1061 = vmatprep.mubr.bf16.mxu0 %v339
  %1062 = vmatmul.mubr.bf16.gmra.mrb[0].mxu0 %v338
  %v1063 = vpop.f32.mrb[0].mxu0
  %v1064 = vadd.f32 %v999, %v1063
  %v1065 = vpop.f32.mrb[0].mxu0
  %v1066 = vpop.f32.mrb[0].mxu0
  %v1067 = vadd.f32 %v1002, %v1066
  %v1068 = vpop.f32.mrb[0].mxu0
  %1069 = vmatprep.mubr.bf16.mxu0 %v348
  %1070 = vmatmul.mubr.bf16.gmra.mrb[0].mxu0 %v347
  %v1071 = vpop.f32.mrb[0].mxu0
  %v1072 = vadd.f32 %v1007, %v1071
  %v1073 = vpop.f32.mrb[0].mxu0
  %v1074 = vpop.f32.mrb[0].mxu0
  %v1075 = vadd.f32 %v1010, %v1074
  %v1076 = vpop.f32.mrb[0].mxu0
  %1077 = vdwg.mxu0
  %1078 = vmatprep.subr.bf16.mxu0 0
  %1079 = vmatpush1.bf16.msra.mxu0 %v738
  %1080 = vmatprep.subr.bf16.mxu0 0
  %1081 = vmatpush1.bf16.msra.mxu0 %v739
  %1082 = vmatprep.subr.bf16.mxu0 0
  %1083 = vmatpush1.bf16.msra.mxu0 %v740
  %1084 = vmatprep.subr.bf16.mxu0 0
  %1085 = vmatpush1.bf16.msra.mxu0 %v741
  %1086 = vmatprep.subr.bf16.mxu0 0
  %1087 = vmatpush1.bf16.msra.mxu0 %v742
  %1088 = vmatprep.subr.bf16.mxu0 0
  %1089 = vmatpush1.bf16.msra.mxu0 %v743
  %1090 = vmatprep.subr.bf16.mxu0 0
  %1091 = vmatpush1.bf16.msra.mxu0 %v744
  %1092 = vmatprep.subr.bf16.mxu0 0
  %1093 = vmatpush1.bf16.msra.mxu0 %v745
  %1094 = vmatprep.subr.bf16.mxu0 0
  %1095 = vmatpush1.bf16.msra.mxu0 0
  %1096 = vmatprep.subr.bf16.mxu0 0
  %1097 = vmatpush1.bf16.msra.mxu0 0
  %1098 = vmatprep.subr.bf16.mxu0 0
  %1099 = vmatpush1.bf16.msra.mxu0 0
  %1100 = vmatprep.subr.bf16.mxu0 0
  %1101 = vmatpush1.bf16.msra.mxu0 0
  %1102 = vmatprep.subr.bf16.mxu0 0
  %1103 = vmatpush1.bf16.msra.mxu0 0
  %1104 = vmatprep.subr.bf16.mxu0 0
  %1105 = vmatpush1.bf16.msra.mxu0 0
  %1106 = vmatprep.subr.bf16.mxu0 0
  %1107 = vmatpush1.bf16.msra.mxu0 0
  %1108 = vmatprep.subr.bf16.mxu0 0
  %1109 = vmatpush1.bf16.msra.mxu0 0
  %1110 = vmatprep.mubr.bf16.mxu0 0
  %1111 = vmatmul.mubr.bf16.gmra.mrb[0].mxu0 %v322
  %v1112 = vpop.f32.mrb[0].mxu0
  %v1113 = vadd.f32 %v1048, %v1112
  %v1114 = vpop.f32.mrb[0].mxu0
  %v1115 = vpop.f32.mrb[0].mxu0
  %v1116 = vadd.f32 %v1051, %v1115
  %v1117 = vpop.f32.mrb[0].mxu0
  %1118 = vmatprep.mubr.bf16.mxu0 0
  %1119 = vmatmul.mubr.bf16.gmra.mrb[0].mxu0 %v331
  %v1120 = vpop.f32.mrb[0].mxu0
  %v1121 = vadd.f32 %v1056, %v1120
  %v1122 = vpop.f32.mrb[0].mxu0
  %v1123 = vpop.f32.mrb[0].mxu0
  %v1124 = vadd.f32 %v1059, %v1123
  %v1125 = vpop.f32.mrb[0].mxu0
  %1126 = vmatprep.mubr.bf16.mxu0 0
  %1127 = vmatmul.mubr.bf16.gmra.mrb[0].mxu0 %v340
  %v1128 = vpop.f32.mrb[0].mxu0
  %v1129 = vadd.f32 %v1064, %v1128
  %v1130 = vpop.f32.mrb[0].mxu0
  %v1131 = vpop.f32.mrb[0].mxu0
  %v1132 = vadd.f32 %v1067, %v1131
  %v1133 = vpop.f32.mrb[0].mxu0
  %1134 = vmatprep.mubr.bf16.mxu0 0
  %1135 = vmatmul.mubr.bf16.gmra.mrb[0].mxu0 %v349
  %v1136 = vpop.f32.mrb[0].mxu0
  %v1137 = vadd.f32 %v1072, %v1136
  %v1138 = vpop.f32.mrb[0].mxu0
  %v1139 = vpop.f32.mrb[0].mxu0
  %v1140 = vadd.f32 %v1075, %v1139
  %v1141 = vpop.f32.mrb[0].mxu0
  %1142 = vdwg.mxu0
  %v1143 = vld [vmem:[%s2] sm:$0x1]
  %v1145 = vlaneseq
  %v1146 = vshrl.u32 %v1145, 7
  %v1147 = vsub.s32 0, %v1146
  %v1148 = vrot.slane %v1143, %v1147
  %v1150 = vmul.f32 %v1113, %v1148
  %v1151 = vmul.f32 %v1116, %v1148
  %v1152 = vmul.f32 %v1121, %v1148
  %v1153 = vmul.f32 %v1124, %v1148
  %v1154 = vmul.f32 %v1129, %v1148
  %v1155 = vmul.f32 %v1132, %v1148
  %v1156 = vmul.f32 %v1137, %v1148
  %v1157 = vmul.f32 %v1140, %v1148
  %v1158 = vld [vmem:[%s3] sm:$0x1]
  %v1160 = vlaneseq
  %v1161 = vshrl.u32 %v1160, 7
  %v1162 = vsub.s32 0, %v1161
  %v1163 = vrot.slane %v1158, %v1162
  %v1165 = vadd.f32 %v1150, %v1163
  %v1166 = vadd.f32 %v1151, %v1163
  %v1167 = vadd.f32 %v1152, %v1163
  %v1168 = vadd.f32 %v1153, %v1163
  %v1169 = vadd.f32 %v1154, %v1163
  %v1170 = vadd.f32 %v1155, %v1163
  %v1171 = vadd.f32 %v1156, %v1163
  %v1172 = vadd.f32 %v1157, %v1163
  %v1173 = vmax.f32 %v1165, 0.0
  %v1174 = vmax.f32 %v1166, 0.0
  %v1175 = vmax.f32 %v1167, 0.0
  %v1176 = vmax.f32 %v1168, 0.0
  %v1177 = vmax.f32 %v1169, 0.0
  %v1178 = vmax.f32 %v1170, 0.0
  %v1179 = vmax.f32 %v1171, 0.0
  %v1180 = vmax.f32 %v1172, 0.0
  %v1181 = vpack.c.bf16 %v1174, %v1173
  %v1182 = vpack.c.bf16 %v1176, %v1175
  %v1183 = vpack.c.bf16 %v1178, %v1177
  %v1184 = vpack.c.bf16 %v1180, %v1179
  %v1189 = vunpack.c.l.b16 %v1181
  %v1190 = vunpack.c.h.b16 %v1181
  %v1191 = vunpack.c.l.b16 %v1182
  %v1192 = vunpack.c.h.b16 %v1182
  %v1193 = vunpack.c.l.b16 %v1183
  %v1194 = vunpack.c.h.b16 %v1183
  %v1195 = vunpack.c.l.b16 %v1184
  %v1196 = vunpack.c.h.b16 %v1184
  %v1197 = vpack.c.b16 %v1189, %v1189
  %v1198 = vpack.c.b16 %v1190, %v1190
  %v1199 = vpack.c.b16 %v1191, %v1191
  %v1200 = vpack.c.b16 %v1192, %v1192
  %v1201 = vpack.c.b16 %v1193, %v1193
  %v1202 = vpack.c.b16 %v1194, %v1194
  %v1203 = vpack.c.b16 %v1195, %v1195
  %v1204 = vpack.c.b16 %v1196, %v1196
  %1213 = vst [vmem:[%s4] sm:$0xf] %v1197
  %1214 = vst [vmem:[%s4 + $0x4] sm:$0xf] %v1198
  %1215 = vst [vmem:[%s4 + $0x8] sm:$0xf] %v1199
  %1216 = vst [vmem:[%s4 + $0xc] sm:$0xf] %v1200
  %1217 = vst [vmem:[%s4 + $0x10] sm:$0xf] %v1201
  %1218 = vst [vmem:[%s4 + $0x14] sm:$0xf] %v1202
  %1219 = vst [vmem:[%s4 + $0x18] sm:$0xf] %v1203
  %1220 = vst [vmem:[%s4 + $0x1c] sm:$0xf] %v1204
  // Predicated region
  $region18: #{reference_encoder_forward.6} parent=0 // pred_check
    _
  $region19: #{reference_encoder_forward.6} parent=0 // pred_check_branch
    %1222 = sbr.rel (0) target = $region21
  $region20: #{reference_encoder_forward.6} parent=0 // pred_region
    _
  $region21: #{reference_encoder_forward.6} parent=0 // pred_fallthru
    _
  // Predicated region
  $region22: #{reference_encoder_forward.6} parent=0 // pred_check
    _
  $region23: #{reference_encoder_forward.6} parent=0 // pred_check_branch
    %1224 = sbr.rel (0) target = $region25
  $region24: #{reference_encoder_forward.6} parent=0 // pred_region
    _
  $region25: #{reference_encoder_forward.6} parent=0 // pred_fallthru
    _

// kernel: reference_encoder_forward.7
$region0: #{reference_encoder_forward.7}
  #allocation0 [shape = 'u32[]', space=smem, size = 0x4, offset = 0x4, fixed_abs, tag = 'smem constant byte address 0x4 - core index']
  #allocation1 [shape = 'u32[144,128]{1,0:T(1,128)}', space=vmem, size = 0x12000, scoped, tag = 'internal scratch']
  %s0 = inlined_call_operand.vmem [shape: bf16[16,1152], index: 0, kind: input, shape index: {}]
  %s1 = inlined_call_operand.vmem [shape: bf16[1152,128], index: 1, kind: input, shape index: {}]
  %s2 = inlined_call_operand.vmem [shape: f32[1,128], index: 2, kind: input, shape index: {}]
  %s3 = inlined_call_operand.vmem [shape: f32[1,128], index: 3, kind: input, shape index: {}]
  %s4 = inlined_call_operand.vmem [shape: bf16[16,128], index: 4, kind: output, shape index: {}]
  %s5 = sld [smem:[#allocation0]]
  $region26: #{reference_encoder_forward.7} parent=0
    _
  %s7 = ssub.s32 1, %s5
  %s8 = scalar_select 0, %s7, %s5
  // Predicated region
  $region2: #{reference_encoder_forward.7} parent=0 // pred_check
    _
  $region3: #{reference_encoder_forward.7} parent=0 // pred_check_branch
    %10 = sbr.rel (0) target = $region5
  $region4: #{reference_encoder_forward.7} parent=0 // pred_region
    _
  $region5: #{reference_encoder_forward.7} parent=0 // pred_fallthru
    _
  // Predicated region
  $region6: #{reference_encoder_forward.7} parent=0 // pred_check
    _
  $region7: #{reference_encoder_forward.7} parent=0 // pred_check_branch
    %12 = sbr.rel (0) target = $region9
  $region8: #{reference_encoder_forward.7} parent=0 // pred_region
    _
  $region9: #{reference_encoder_forward.7} parent=0 // pred_fallthru
    _
  // Predicated region
  $region10: #{reference_encoder_forward.7} parent=0 // pred_check
    _
  $region11: #{reference_encoder_forward.7} parent=0 // pred_check_branch
    %14 = sbr.rel (0) target = $region13
  $region12: #{reference_encoder_forward.7} parent=0 // pred_region
    _
  $region13: #{reference_encoder_forward.7} parent=0 // pred_fallthru
    _
  // Predicated region
  $region14: #{reference_encoder_forward.7} parent=0 // pred_check
    _
  $region15: #{reference_encoder_forward.7} parent=0 // pred_check_branch
    %16 = sbr.rel (0) target = $region17
  $region16: #{reference_encoder_forward.7} parent=0 // pred_region
    _
  $region17: #{reference_encoder_forward.7} parent=0 // pred_fallthru
    _
  %v18 = vld [vmem:[%s0] sm:$0xff]
  %v19 = vld [vmem:[%s0 + $0x8] sm:$0xff]
  %v20 = vld [vmem:[%s0 + $0x10] sm:$0xff]
  %v21 = vld [vmem:[%s0 + $0x18] sm:$0xff]
  %v22 = vld [vmem:[%s0 + $0x20] sm:$0xf]
  %v23 = vld [vmem:[%s0 + $0x24] sm:$0xff]
  %v24 = vld [vmem:[%s0 + $0x2c] sm:$0xff]
  %v25 = vld [vmem:[%s0 + $0x34] sm:$0xff]
  %v26 = vld [vmem:[%s0 + $0x3c] sm:$0xff]
  %v27 = vld [vmem:[%s0 + $0x44] sm:$0xf]
  %v28 = vld [vmem:[%s1] sm:$0xf]
  %v29 = vld [vmem:[%s1 + $0x4] sm:$0xf]
  %v30 = vld [vmem:[%s1 + $0x8] sm:$0xf]
  %v31 = vld [vmem:[%s1 + $0xc] sm:$0xf]
  %v32 = vld [vmem:[%s1 + $0x10] sm:$0xf]
  %v33 = vld [vmem:[%s1 + $0x14] sm:$0xf]
  %v34 = vld [vmem:[%s1 + $0x18] sm:$0xf]
  %v35 = vld [vmem:[%s1 + $0x1c] sm:$0xf]
  %v36 = vld [vmem:[%s1 + $0x20] sm:$0xf]
  %v37 = vld [vmem:[%s1 + $0x24] sm:$0xf]
  %v38 = vld [vmem:[%s1 + $0x28] sm:$0xf]
  %v39 = vld [vmem:[%s1 + $0x2c] sm:$0xf]
  %v40 = vld [vmem:[%s1 + $0x30] sm:$0xf]
  %v41 = vld [vmem:[%s1 + $0x34] sm:$0xf]
  %v42 = vld [vmem:[%s1 + $0x38] sm:$0xf]
  %v43 = vld [vmem:[%s1 + $0x3c] sm:$0xf]
  %v44 = vld [vmem:[%s1 + $0x40] sm:$0xf]
  %v45 = vld [vmem:[%s1 + $0x44] sm:$0xf]
  %v46 = vld [vmem:[%s1 + $0x48] sm:$0xf]
  %v47 = vld [vmem:[%s1 + $0x4c] sm:$0xf]
  %v48 = vld [vmem:[%s1 + $0x50] sm:$0xf]
  %v49 = vld [vmem:[%s1 + $0x54] sm:$0xf]
  %v50 = vld [vmem:[%s1 + $0x58] sm:$0xf]
  %v51 = vld [vmem:[%s1 + $0x5c] sm:$0xf]
  %v52 = vld [vmem:[%s1 + $0x60] sm:$0xf]
  %v53 = vld [vmem:[%s1 + $0x64] sm:$0xf]
  %v54 = vld [vmem:[%s1 + $0x68] sm:$0xf]
  %v55 = vld [vmem:[%s1 + $0x6c] sm:$0xf]
  %v56 = vld [vmem:[%s1 + $0x70] sm:$0xf]
  %v57 = vld [vmem:[%s1 + $0x74] sm:$0xf]
  %v58 = vld [vmem:[%s1 + $0x78] sm:$0xf]
  %v59 = vld [vmem:[%s1 + $0x7c] sm:$0xf]
  %v60 = vld [vmem:[%s1 + $0x80] sm:$0xf]
  %v61 = vld [vmem:[%s1 + $0x84] sm:$0xf]
  %v62 = vld [vmem:[%s1 + $0x88] sm:$0xf]
  %v63 = vld [vmem:[%s1 + $0x8c] sm:$0xf]
  %v64 = vld [vmem:[%s1 + $0x90] sm:$0xf]
  %v65 = vld [vmem:[%s1 + $0x94] sm:$0xf]
  %v66 = vld [vmem:[%s1 + $0x98] sm:$0xf]
  %v67 = vld [vmem:[%s1 + $0x9c] sm:$0xf]
  %v68 = vld [vmem:[%s1 + $0xa0] sm:$0xf]
  %v69 = vld [vmem:[%s1 + $0xa4] sm:$0xf]
  %v70 = vld [vmem:[%s1 + $0xa8] sm:$0xf]
  %v71 = vld [vmem:[%s1 + $0xac] sm:$0xf]
  %v72 = vld [vmem:[%s1 + $0xb0] sm:$0xf]
  %v73 = vld [vmem:[%s1 + $0xb4] sm:$0xf]
  %v74 = vld [vmem:[%s1 + $0xb8] sm:$0xf]
  %v75 = vld [vmem:[%s1 + $0xbc] sm:$0xf]
  %v76 = vld [vmem:[%s1 + $0xc0] sm:$0xf]
  %v77 = vld [vmem:[%s1 + $0xc4] sm:$0xf]
  %v78 = vld [vmem:[%s1 + $0xc8] sm:$0xf]
  %v79 = vld [vmem:[%s1 + $0xcc] sm:$0xf]
  %v80 = vld [vmem:[%s1 + $0xd0] sm:$0xf]
  %v81 = vld [vmem:[%s1 + $0xd4] sm:$0xf]
  %v82 = vld [vmem:[%s1 + $0xd8] sm:$0xf]
  %v83 = vld [vmem:[%s1 + $0xdc] sm:$0xf]
  %v84 = vld [vmem:[%s1 + $0xe0] sm:$0xf]
  %v85 = vld [vmem:[%s1 + $0xe4] sm:$0xf]
  %v86 = vld [vmem:[%s1 + $0xe8] sm:$0xf]
  %v87 = vld [vmem:[%s1 + $0xec] sm:$0xf]
  %v88 = vld [vmem:[%s1 + $0xf0] sm:$0xf]
  %v89 = vld [vmem:[%s1 + $0xf4] sm:$0xf]
  %v90 = vld [vmem:[%s1 + $0xf8] sm:$0xf]
  %v91 = vld [vmem:[%s1 + $0xfc] sm:$0xf]
  %v92 = vld [vmem:[%s1 + $0x100] sm:$0xf]
  %v93 = vld [vmem:[%s1 + $0x104] sm:$0xf]
  %v94 = vld [vmem:[%s1 + $0x108] sm:$0xf]
  %v95 = vld [vmem:[%s1 + $0x10c] sm:$0xf]
  %v96 = vld [vmem:[%s1 + $0x110] sm:$0xf]
  %v97 = vld [vmem:[%s1 + $0x114] sm:$0xf]
  %v98 = vld [vmem:[%s1 + $0x118] sm:$0xf]
  %v99 = vld [vmem:[%s1 + $0x11c] sm:$0xf]
  %v100 = vld [vmem:[%s1 + $0x120] sm:$0xf]
  %v101 = vld [vmem:[%s1 + $0x124] sm:$0xf]
  %v102 = vld [vmem:[%s1 + $0x128] sm:$0xf]
  %v103 = vld [vmem:[%s1 + $0x12c] sm:$0xf]
  %v104 = vld [vmem:[%s1 + $0x130] sm:$0xf]
  %v105 = vld [vmem:[%s1 + $0x134] sm:$0xf]
  %v106 = vld [vmem:[%s1 + $0x138] sm:$0xf]
  %v107 = vld [vmem:[%s1 + $0x13c] sm:$0xf]
  %v108 = vld [vmem:[%s1 + $0x140] sm:$0xf]
  %v109 = vld [vmem:[%s1 + $0x144] sm:$0xf]
  %v110 = vld [vmem:[%s1 + $0x148] sm:$0xf]
  %v111 = vld [vmem:[%s1 + $0x14c] sm:$0xf]
  %v112 = vld [vmem:[%s1 + $0x150] sm:$0xf]
  %v113 = vld [vmem:[%s1 + $0x154] sm:$0xf]
  %v114 = vld [vmem:[%s1 + $0x158] sm:$0xf]
  %v115 = vld [vmem:[%s1 + $0x15c] sm:$0xf]
  %v116 = vld [vmem:[%s1 + $0x160] sm:$0xf]
  %v117 = vld [vmem:[%s1 + $0x164] sm:$0xf]
  %v118 = vld [vmem:[%s1 + $0x168] sm:$0xf]
  %v119 = vld [vmem:[%s1 + $0x16c] sm:$0xf]
  %v120 = vld [vmem:[%s1 + $0x170] sm:$0xf]
  %v121 = vld [vmem:[%s1 + $0x174] sm:$0xf]
  %v122 = vld [vmem:[%s1 + $0x178] sm:$0xf]
  %v123 = vld [vmem:[%s1 + $0x17c] sm:$0xf]
  %v124 = vld [vmem:[%s1 + $0x180] sm:$0xf]
  %v125 = vld [vmem:[%s1 + $0x184] sm:$0xf]
  %v126 = vld [vmem:[%s1 + $0x188] sm:$0xf]
  %v127 = vld [vmem:[%s1 + $0x18c] sm:$0xf]
  %v128 = vld [vmem:[%s1 + $0x190] sm:$0xf]
  %v129 = vld [vmem:[%s1 + $0x194] sm:$0xf]
  %v130 = vld [vmem:[%s1 + $0x198] sm:$0xf]
  %v131 = vld [vmem:[%s1 + $0x19c] sm:$0xf]
  %v132 = vld [vmem:[%s1 + $0x1a0] sm:$0xf]
  %v133 = vld [vmem:[%s1 + $0x1a4] sm:$0xf]
  %v134 = vld [vmem:[%s1 + $0x1a8] sm:$0xf]
  %v135 = vld [vmem:[%s1 + $0x1ac] sm:$0xf]
  %v136 = vld [vmem:[%s1 + $0x1b0] sm:$0xf]
  %v137 = vld [vmem:[%s1 + $0x1b4] sm:$0xf]
  %v138 = vld [vmem:[%s1 + $0x1b8] sm:$0xf]
  %v139 = vld [vmem:[%s1 + $0x1bc] sm:$0xf]
  %v140 = vld [vmem:[%s1 + $0x1c0] sm:$0xf]
  %v141 = vld [vmem:[%s1 + $0x1c4] sm:$0xf]
  %v142 = vld [vmem:[%s1 + $0x1c8] sm:$0xf]
  %v143 = vld [vmem:[%s1 + $0x1cc] sm:$0xf]
  %v144 = vld [vmem:[%s1 + $0x1d0] sm:$0xf]
  %v145 = vld [vmem:[%s1 + $0x1d4] sm:$0xf]
  %v146 = vld [vmem:[%s1 + $0x1d8] sm:$0xf]
  %v147 = vld [vmem:[%s1 + $0x1dc] sm:$0xf]
  %v148 = vld [vmem:[%s1 + $0x1e0] sm:$0xf]
  %v149 = vld [vmem:[%s1 + $0x1e4] sm:$0xf]
  %v150 = vld [vmem:[%s1 + $0x1e8] sm:$0xf]
  %v151 = vld [vmem:[%s1 + $0x1ec] sm:$0xf]
  %v152 = vld [vmem:[%s1 + $0x1f0] sm:$0xf]
  %v153 = vld [vmem:[%s1 + $0x1f4] sm:$0xf]
  %v154 = vld [vmem:[%s1 + $0x1f8] sm:$0xf]
  %v155 = vld [vmem:[%s1 + $0x1fc] sm:$0xf]
  %v156 = vld [vmem:[%s1 + $0x200] sm:$0xf]
  %v157 = vld [vmem:[%s1 + $0x204] sm:$0xf]
  %v158 = vld [vmem:[%s1 + $0x208] sm:$0xf]
  %v159 = vld [vmem:[%s1 + $0x20c] sm:$0xf]
  %v160 = vld [vmem:[%s1 + $0x210] sm:$0xf]
  %v161 = vld [vmem:[%s1 + $0x214] sm:$0xf]
  %v162 = vld [vmem:[%s1 + $0x218] sm:$0xf]
  %v163 = vld [vmem:[%s1 + $0x21c] sm:$0xf]
  %v164 = vld [vmem:[%s1 + $0x220] sm:$0xf]
  %v165 = vld [vmem:[%s1 + $0x224] sm:$0xf]
  %v166 = vld [vmem:[%s1 + $0x228] sm:$0xf]
  %v167 = vld [vmem:[%s1 + $0x22c] sm:$0xf]
  %v168 = vld [vmem:[%s1 + $0x230] sm:$0xf]
  %v169 = vld [vmem:[%s1 + $0x234] sm:$0xf]
  %v170 = vld [vmem:[%s1 + $0x238] sm:$0xf]
  %v171 = vld [vmem:[%s1 + $0x23c] sm:$0xf]
  %v182 = vunpack.c.l.b16 %v18
  %v183 = vunpack.c.h.b16 %v18
  %v184 = vunpack.c.l.b16 %v19
  %v185 = vunpack.c.h.b16 %v19
  %v186 = vunpack.c.l.b16 %v20
  %v187 = vunpack.c.h.b16 %v20
  %v188 = vunpack.c.l.b16 %v21
  %v189 = vunpack.c.h.b16 %v21
  %v190 = vunpack.c.l.b16 %v22
  %v191 = vunpack.c.l.b16 %v23
  %v192 = vunpack.c.h.b16 %v23
  %v193 = vunpack.c.l.b16 %v24
  %v194 = vunpack.c.h.b16 %v24
  %v195 = vunpack.c.l.b16 %v25
  %v196 = vunpack.c.h.b16 %v25
  %v197 = vunpack.c.l.b16 %v26
  %v198 = vunpack.c.h.b16 %v26
  %v199 = vunpack.c.l.b16 %v27
  %v200 = vpack.c.b16 %v191, %v182
  %v201 = vpack.c.b16 %v192, %v183
  %v202 = vpack.c.b16 %v193, %v184
  %v203 = vpack.c.b16 %v194, %v185
  %v204 = vpack.c.b16 %v195, %v186
  %v205 = vpack.c.b16 %v196, %v187
  %v206 = vpack.c.b16 %v197, %v188
  %v207 = vpack.c.b16 %v198, %v189
  %v208 = vpack.c.b16 %v199, %v190
  %v362 = vunpack.c.l.b16 %v28
  %v363 = vunpack.c.l.b16 %v29
  %v364 = vunpack.c.l.b16 %v30
  %v365 = vunpack.c.l.b16 %v31
  %v366 = vunpack.c.l.b16 %v32
  %v367 = vunpack.c.l.b16 %v33
  %v368 = vunpack.c.l.b16 %v34
  %v369 = vunpack.c.l.b16 %v35
  %v370 = vunpack.c.l.b16 %v36
  %v371 = vunpack.c.l.b16 %v37
  %v372 = vunpack.c.l.b16 %v38
  %v373 = vunpack.c.l.b16 %v39
  %v374 = vunpack.c.l.b16 %v40
  %v375 = vunpack.c.l.b16 %v41
  %v376 = vunpack.c.l.b16 %v42
  %v377 = vunpack.c.l.b16 %v43
  %v378 = vunpack.c.l.b16 %v44
  %v379 = vunpack.c.l.b16 %v45
  %v380 = vunpack.c.l.b16 %v46
  %v381 = vunpack.c.l.b16 %v47
  %v382 = vunpack.c.l.b16 %v48
  %v383 = vunpack.c.l.b16 %v49
  %v384 = vunpack.c.l.b16 %v50
  %v385 = vunpack.c.l.b16 %v51
  %v386 = vunpack.c.l.b16 %v52
  %v387 = vunpack.c.l.b16 %v53
  %v388 = vunpack.c.l.b16 %v54
  %v389 = vunpack.c.l.b16 %v55
  %v390 = vunpack.c.l.b16 %v56
  %v391 = vunpack.c.l.b16 %v57
  %v392 = vunpack.c.l.b16 %v58
  %v393 = vunpack.c.l.b16 %v59
  %v394 = vunpack.c.l.b16 %v60
  %v395 = vunpack.c.l.b16 %v61
  %v396 = vunpack.c.l.b16 %v62
  %v397 = vunpack.c.l.b16 %v63
  %v398 = vunpack.c.l.b16 %v64
  %v399 = vunpack.c.l.b16 %v65
  %v400 = vunpack.c.l.b16 %v66
  %v401 = vunpack.c.l.b16 %v67
  %v402 = vunpack.c.l.b16 %v68
  %v403 = vunpack.c.l.b16 %v69
  %v404 = vunpack.c.l.b16 %v70
  %v405 = vunpack.c.l.b16 %v71
  %v406 = vunpack.c.l.b16 %v72
  %v407 = vunpack.c.l.b16 %v73
  %v408 = vunpack.c.l.b16 %v74
  %v409 = vunpack.c.l.b16 %v75
  %v410 = vunpack.c.l.b16 %v76
  %v411 = vunpack.c.l.b16 %v77
  %v412 = vunpack.c.l.b16 %v78
  %v413 = vunpack.c.l.b16 %v79
  %v414 = vunpack.c.l.b16 %v80
  %v415 = vunpack.c.l.b16 %v81
  %v416 = vunpack.c.l.b16 %v82
  %v417 = vunpack.c.l.b16 %v83
  %v418 = vunpack.c.l.b16 %v84
  %v419 = vunpack.c.l.b16 %v85
  %v420 = vunpack.c.l.b16 %v86
  %v421 = vunpack.c.l.b16 %v87
  %v422 = vunpack.c.l.b16 %v88
  %v423 = vunpack.c.l.b16 %v89
  %v424 = vunpack.c.l.b16 %v90
  %v425 = vunpack.c.l.b16 %v91
  %v426 = vunpack.c.l.b16 %v92
  %v427 = vunpack.c.l.b16 %v93
  %v428 = vunpack.c.l.b16 %v94
  %v429 = vunpack.c.l.b16 %v95
  %v430 = vunpack.c.l.b16 %v96
  %v431 = vunpack.c.l.b16 %v97
  %v432 = vunpack.c.l.b16 %v98
  %v433 = vunpack.c.l.b16 %v99
  %v434 = vunpack.c.l.b16 %v100
  %v435 = vunpack.c.l.b16 %v101
  %v436 = vunpack.c.l.b16 %v102
  %v437 = vunpack.c.l.b16 %v103
  %v438 = vunpack.c.l.b16 %v104
  %v439 = vunpack.c.l.b16 %v105
  %v440 = vunpack.c.l.b16 %v106
  %v441 = vunpack.c.l.b16 %v107
  %v442 = vunpack.c.l.b16 %v108
  %v443 = vunpack.c.l.b16 %v109
  %v444 = vunpack.c.l.b16 %v110
  %v445 = vunpack.c.l.b16 %v111
  %v446 = vunpack.c.l.b16 %v112
  %v447 = vunpack.c.l.b16 %v113
  %v448 = vunpack.c.l.b16 %v114
  %v449 = vunpack.c.l.b16 %v115
  %v450 = vunpack.c.l.b16 %v116
  %v451 = vunpack.c.l.b16 %v117
  %v452 = vunpack.c.l.b16 %v118
  %v453 = vunpack.c.l.b16 %v119
  %v454 = vunpack.c.l.b16 %v120
  %v455 = vunpack.c.l.b16 %v121
  %v456 = vunpack.c.l.b16 %v122
  %v457 = vunpack.c.l.b16 %v123
  %v458 = vunpack.c.l.b16 %v124
  %v459 = vunpack.c.l.b16 %v125
  %v460 = vunpack.c.l.b16 %v126
  %v461 = vunpack.c.l.b16 %v127
  %v462 = vunpack.c.l.b16 %v128
  %v463 = vunpack.c.l.b16 %v129
  %v464 = vunpack.c.l.b16 %v130
  %v465 = vunpack.c.l.b16 %v131
  %v466 = vunpack.c.l.b16 %v132
  %v467 = vunpack.c.l.b16 %v133
  %v468 = vunpack.c.l.b16 %v134
  %v469 = vunpack.c.l.b16 %v135
  %v470 = vunpack.c.l.b16 %v136
  %v471 = vunpack.c.l.b16 %v137
  %v472 = vunpack.c.l.b16 %v138
  %v473 = vunpack.c.l.b16 %v139
  %v474 = vunpack.c.l.b16 %v140
  %v475 = vunpack.c.l.b16 %v141
  %v476 = vunpack.c.l.b16 %v142
  %v477 = vunpack.c.l.b16 %v143
  %v478 = vunpack.c.l.b16 %v144
  %v479 = vunpack.c.l.b16 %v145
  %v480 = vunpack.c.l.b16 %v146
  %v481 = vunpack.c.l.b16 %v147
  %v482 = vunpack.c.l.b16 %v148
  %v483 = vunpack.c.l.b16 %v149
  %v484 = vunpack.c.l.b16 %v150
  %v485 = vunpack.c.l.b16 %v151
  %v486 = vunpack.c.l.b16 %v152
  %v487 = vunpack.c.l.b16 %v153
  %v488 = vunpack.c.l.b16 %v154
  %v489 = vunpack.c.l.b16 %v155
  %v490 = vunpack.c.l.b16 %v156
  %v491 = vunpack.c.l.b16 %v157
  %v492 = vunpack.c.l.b16 %v158
  %v493 = vunpack.c.l.b16 %v159
  %v494 = vunpack.c.l.b16 %v160
  %v495 = vunpack.c.l.b16 %v161
  %v496 = vunpack.c.l.b16 %v162
  %v497 = vunpack.c.l.b16 %v163
  %v498 = vunpack.c.l.b16 %v164
  %v499 = vunpack.c.l.b16 %v165
  %v500 = vunpack.c.l.b16 %v166
  %v501 = vunpack.c.l.b16 %v167
  %v502 = vunpack.c.l.b16 %v168
  %v503 = vunpack.c.l.b16 %v169
  %v504 = vunpack.c.l.b16 %v170
  %v505 = vunpack.c.l.b16 %v171
  %v506 = vpack.c.b16 %v363, %v362
  %v507 = vpack.c.b16 %v365, %v364
  %v508 = vpack.c.b16 %v367, %v366
  %v509 = vpack.c.b16 %v369, %v368
  %v510 = vpack.c.b16 %v371, %v370
  %v511 = vpack.c.b16 %v373, %v372
  %v512 = vpack.c.b16 %v375, %v374
  %v513 = vpack.c.b16 %v377, %v376
  %v514 = vpack.c.b16 %v379, %v378
  %v515 = vpack.c.b16 %v381, %v380
  %v516 = vpack.c.b16 %v383, %v382
  %v517 = vpack.c.b16 %v385, %v384
  %v518 = vpack.c.b16 %v387, %v386
  %v519 = vpack.c.b16 %v389, %v388
  %v520 = vpack.c.b16 %v391, %v390
  %v521 = vpack.c.b16 %v393, %v392
  %v522 = vpack.c.b16 %v395, %v394
  %v523 = vpack.c.b16 %v397, %v396
  %v524 = vpack.c.b16 %v399, %v398
  %v525 = vpack.c.b16 %v401, %v400
  %v526 = vpack.c.b16 %v403, %v402
  %v527 = vpack.c.b16 %v405, %v404
  %v528 = vpack.c.b16 %v407, %v406
  %v529 = vpack.c.b16 %v409, %v408
  %v530 = vpack.c.b16 %v411, %v410
  %v531 = vpack.c.b16 %v413, %v412
  %v532 = vpack.c.b16 %v415, %v414
  %v533 = vpack.c.b16 %v417, %v416
  %v534 = vpack.c.b16 %v419, %v418
  %v535 = vpack.c.b16 %v421, %v420
  %v536 = vpack.c.b16 %v423, %v422
  %v537 = vpack.c.b16 %v425, %v424
  %v538 = vpack.c.b16 %v427, %v426
  %v539 = vpack.c.b16 %v429, %v428
  %v540 = vpack.c.b16 %v431, %v430
  %v541 = vpack.c.b16 %v433, %v432
  %v542 = vpack.c.b16 %v435, %v434
  %v543 = vpack.c.b16 %v437, %v436
  %v544 = vpack.c.b16 %v439, %v438
  %v545 = vpack.c.b16 %v441, %v440
  %v546 = vpack.c.b16 %v443, %v442
  %v547 = vpack.c.b16 %v445, %v444
  %v548 = vpack.c.b16 %v447, %v446
  %v549 = vpack.c.b16 %v449, %v448
  %v550 = vpack.c.b16 %v451, %v450
  %v551 = vpack.c.b16 %v453, %v452
  %v552 = vpack.c.b16 %v455, %v454
  %v553 = vpack.c.b16 %v457, %v456
  %v554 = vpack.c.b16 %v459, %v458
  %v555 = vpack.c.b16 %v461, %v460
  %v556 = vpack.c.b16 %v463, %v462
  %v557 = vpack.c.b16 %v465, %v464
  %v558 = vpack.c.b16 %v467, %v466
  %v559 = vpack.c.b16 %v469, %v468
  %v560 = vpack.c.b16 %v471, %v470
  %v561 = vpack.c.b16 %v473, %v472
  %v562 = vpack.c.b16 %v475, %v474
  %v563 = vpack.c.b16 %v477, %v476
  %v564 = vpack.c.b16 %v479, %v478
  %v565 = vpack.c.b16 %v481, %v480
  %v566 = vpack.c.b16 %v483, %v482
  %v567 = vpack.c.b16 %v485, %v484
  %v568 = vpack.c.b16 %v487, %v486
  %v569 = vpack.c.b16 %v489, %v488
  %v570 = vpack.c.b16 %v491, %v490
  %v571 = vpack.c.b16 %v493, %v492
  %v572 = vpack.c.b16 %v495, %v494
  %v573 = vpack.c.b16 %v497, %v496
  %v574 = vpack.c.b16 %v499, %v498
  %v575 = vpack.c.b16 %v501, %v500
  %v576 = vpack.c.b16 %v503, %v502
  %v577 = vpack.c.b16 %v505, %v504
  %650 = vmatprep.subr.bf16.mxu0 0
  %651 = vmatpush1.bf16.msra.mxu0 %v506
  %652 = vmatprep.subr.bf16.mxu0 0
  %653 = vmatpush1.bf16.msra.mxu0 %v507
  %654 = vmatprep.subr.bf16.mxu0 0
  %655 = vmatpush1.bf16.msra.mxu0 %v508
  %656 = vmatprep.subr.bf16.mxu0 0
  %657 = vmatpush1.bf16.msra.mxu0 %v509
  %658 = vmatprep.subr.bf16.mxu0 0
  %659 = vmatpush1.bf16.msra.mxu0 %v510
  %660 = vmatprep.subr.bf16.mxu0 0
  %661 = vmatpush1.bf16.msra.mxu0 %v511
  %662 = vmatprep.subr.bf16.mxu0 0
  %663 = vmatpush1.bf16.msra.mxu0 %v512
  %664 = vmatprep.subr.bf16.mxu0 0
  %665 = vmatpush1.bf16.msra.mxu0 %v513
  %666 = vmatprep.subr.bf16.mxu0 0
  %667 = vmatpush1.bf16.msra.mxu0 %v514
  %668 = vmatprep.subr.bf16.mxu0 0
  %669 = vmatpush1.bf16.msra.mxu0 %v515
  %670 = vmatprep.subr.bf16.mxu0 0
  %671 = vmatpush1.bf16.msra.mxu0 %v516
  %672 = vmatprep.subr.bf16.mxu0 0
  %673 = vmatpush1.bf16.msra.mxu0 %v517
  %674 = vmatprep.subr.bf16.mxu0 0
  %675 = vmatpush1.bf16.msra.mxu0 %v518
  %676 = vmatprep.subr.bf16.mxu0 0
  %677 = vmatpush1.bf16.msra.mxu0 %v519
  %678 = vmatprep.subr.bf16.mxu0 0
  %679 = vmatpush1.bf16.msra.mxu0 %v520
  %680 = vmatprep.subr.bf16.mxu0 0
  %681 = vmatpush1.bf16.msra.mxu0 %v521
  %682 = vmatprep.mubr.bf16.mxu0 %v201
  %683 = vmatmul.mubr.bf16.gmra.mrb[0].mxu0 %v200
  %v684 = vpop.f32.mrb[0].mxu0
  %v685 = vadd.f32 0.0, %v684
  %v686 = vpop.f32.mrb[0].mxu0
  %v687 = vpop.f32.mrb[0].mxu0
  %v688 = vadd.f32 0.0, %v687
  %v689 = vpop.f32.mrb[0].mxu0
  %690 = vdwg.mxu0
  %691 = vmatprep.subr.bf16.mxu0 0
  %692 = vmatpush1.bf16.msra.mxu0 %v522
  %693 = vmatprep.subr.bf16.mxu0 0
  %694 = vmatpush1.bf16.msra.mxu0 %v523
  %695 = vmatprep.subr.bf16.mxu0 0
  %696 = vmatpush1.bf16.msra.mxu0 %v524
  %697 = vmatprep.subr.bf16.mxu0 0
  %698 = vmatpush1.bf16.msra.mxu0 %v525
  %699 = vmatprep.subr.bf16.mxu0 0
  %700 = vmatpush1.bf16.msra.mxu0 %v526
  %701 = vmatprep.subr.bf16.mxu0 0
  %702 = vmatpush1.bf16.msra.mxu0 %v527
  %703 = vmatprep.subr.bf16.mxu0 0
  %704 = vmatpush1.bf16.msra.mxu0 %v528
  %705 = vmatprep.subr.bf16.mxu0 0
  %706 = vmatpush1.bf16.msra.mxu0 %v529
  %707 = vmatprep.subr.bf16.mxu0 0
  %708 = vmatpush1.bf16.msra.mxu0 %v530
  %709 = vmatprep.subr.bf16.mxu0 0
  %710 = vmatpush1.bf16.msra.mxu0 %v531
  %711 = vmatprep.subr.bf16.mxu0 0
  %712 = vmatpush1.bf16.msra.mxu0 %v532
  %713 = vmatprep.subr.bf16.mxu0 0
  %714 = vmatpush1.bf16.msra.mxu0 %v533
  %715 = vmatprep.subr.bf16.mxu0 0
  %716 = vmatpush1.bf16.msra.mxu0 %v534
  %717 = vmatprep.subr.bf16.mxu0 0
  %718 = vmatpush1.bf16.msra.mxu0 %v535
  %719 = vmatprep.subr.bf16.mxu0 0
  %720 = vmatpush1.bf16.msra.mxu0 %v536
  %721 = vmatprep.subr.bf16.mxu0 0
  %722 = vmatpush1.bf16.msra.mxu0 %v537
  %723 = vmatprep.mubr.bf16.mxu0 %v203
  %724 = vmatmul.mubr.bf16.gmra.mrb[0].mxu0 %v202
  %v725 = vpop.f32.mrb[0].mxu0
  %v726 = vadd.f32 %v685, %v725
  %v727 = vpop.f32.mrb[0].mxu0
  %v728 = vpop.f32.mrb[0].mxu0
  %v729 = vadd.f32 %v688, %v728
  %v730 = vpop.f32.mrb[0].mxu0
  %731 = vdwg.mxu0
  %732 = vmatprep.subr.bf16.mxu0 0
  %733 = vmatpush1.bf16.msra.mxu0 %v538
  %734 = vmatprep.subr.bf16.mxu0 0
  %735 = vmatpush1.bf16.msra.mxu0 %v539
  %736 = vmatprep.subr.bf16.mxu0 0
  %737 = vmatpush1.bf16.msra.mxu0 %v540
  %738 = vmatprep.subr.bf16.mxu0 0
  %739 = vmatpush1.bf16.msra.mxu0 %v541
  %740 = vmatprep.subr.bf16.mxu0 0
  %741 = vmatpush1.bf16.msra.mxu0 %v542
  %742 = vmatprep.subr.bf16.mxu0 0
  %743 = vmatpush1.bf16.msra.mxu0 %v543
  %744 = vmatprep.subr.bf16.mxu0 0
  %745 = vmatpush1.bf16.msra.mxu0 %v544
  %746 = vmatprep.subr.bf16.mxu0 0
  %747 = vmatpush1.bf16.msra.mxu0 %v545
  %748 = vmatprep.subr.bf16.mxu0 0
  %749 = vmatpush1.bf16.msra.mxu0 %v546
  %750 = vmatprep.subr.bf16.mxu0 0
  %751 = vmatpush1.bf16.msra.mxu0 %v547
  %752 = vmatprep.subr.bf16.mxu0 0
  %753 = vmatpush1.bf16.msra.mxu0 %v548
  %754 = vmatprep.subr.bf16.mxu0 0
  %755 = vmatpush1.bf16.msra.mxu0 %v549
  %756 = vmatprep.subr.bf16.mxu0 0
  %757 = vmatpush1.bf16.msra.mxu0 %v550
  %758 = vmatprep.subr.bf16.mxu0 0
  %759 = vmatpush1.bf16.msra.mxu0 %v551
  %760 = vmatprep.subr.bf16.mxu0 0
  %761 = vmatpush1.bf16.msra.mxu0 %v552
  %762 = vmatprep.subr.bf16.mxu0 0
  %763 = vmatpush1.bf16.msra.mxu0 %v553
  %764 = vmatprep.mubr.bf16.mxu0 %v205
  %765 = vmatmul.mubr.bf16.gmra.mrb[0].mxu0 %v204
  %v766 = vpop.f32.mrb[0].mxu0
  %v767 = vadd.f32 %v726, %v766
  %v768 = vpop.f32.mrb[0].mxu0
  %v769 = vpop.f32.mrb[0].mxu0
  %v770 = vadd.f32 %v729, %v769
  %v771 = vpop.f32.mrb[0].mxu0
  %772 = vdwg.mxu0
  %773 = vmatprep.subr.bf16.mxu0 0
  %774 = vmatpush1.bf16.msra.mxu0 %v554
  %775 = vmatprep.subr.bf16.mxu0 0
  %776 = vmatpush1.bf16.msra.mxu0 %v555
  %777 = vmatprep.subr.bf16.mxu0 0
  %778 = vmatpush1.bf16.msra.mxu0 %v556
  %779 = vmatprep.subr.bf16.mxu0 0
  %780 = vmatpush1.bf16.msra.mxu0 %v557
  %781 = vmatprep.subr.bf16.mxu0 0
  %782 = vmatpush1.bf16.msra.mxu0 %v558
  %783 = vmatprep.subr.bf16.mxu0 0
  %784 = vmatpush1.bf16.msra.mxu0 %v559
  %785 = vmatprep.subr.bf16.mxu0 0
  %786 = vmatpush1.bf16.msra.mxu0 %v560
  %787 = vmatprep.subr.bf16.mxu0 0
  %788 = vmatpush1.bf16.msra.mxu0 %v561
  %789 = vmatprep.subr.bf16.mxu0 0
  %790 = vmatpush1.bf16.msra.mxu0 %v562
  %791 = vmatprep.subr.bf16.mxu0 0
  %792 = vmatpush1.bf16.msra.mxu0 %v563
  %793 = vmatprep.subr.bf16.mxu0 0
  %794 = vmatpush1.bf16.msra.mxu0 %v564
  %795 = vmatprep.subr.bf16.mxu0 0
  %796 = vmatpush1.bf16.msra.mxu0 %v565
  %797 = vmatprep.subr.bf16.mxu0 0
  %798 = vmatpush1.bf16.msra.mxu0 %v566
  %799 = vmatprep.subr.bf16.mxu0 0
  %800 = vmatpush1.bf16.msra.mxu0 %v567
  %801 = vmatprep.subr.bf16.mxu0 0
  %802 = vmatpush1.bf16.msra.mxu0 %v568
  %803 = vmatprep.subr.bf16.mxu0 0
  %804 = vmatpush1.bf16.msra.mxu0 %v569
  %805 = vmatprep.mubr.bf16.mxu0 %v207
  %806 = vmatmul.mubr.bf16.gmra.mrb[0].mxu0 %v206
  %v807 = vpop.f32.mrb[0].mxu0
  %v808 = vadd.f32 %v767, %v807
  %v809 = vpop.f32.mrb[0].mxu0
  %v810 = vpop.f32.mrb[0].mxu0
  %v811 = vadd.f32 %v770, %v810
  %v812 = vpop.f32.mrb[0].mxu0
  %813 = vdwg.mxu0
  %814 = vmatprep.subr.bf16.mxu0 0
  %815 = vmatpush1.bf16.msra.mxu0 %v570
  %816 = vmatprep.subr.bf16.mxu0 0
  %817 = vmatpush1.bf16.msra.mxu0 %v571
  %818 = vmatprep.subr.bf16.mxu0 0
  %819 = vmatpush1.bf16.msra.mxu0 %v572
  %820 = vmatprep.subr.bf16.mxu0 0
  %821 = vmatpush1.bf16.msra.mxu0 %v573
  %822 = vmatprep.subr.bf16.mxu0 0
  %823 = vmatpush1.bf16.msra.mxu0 %v574
  %824 = vmatprep.subr.bf16.mxu0 0
  %825 = vmatpush1.bf16.msra.mxu0 %v575
  %826 = vmatprep.subr.bf16.mxu0 0
  %827 = vmatpush1.bf16.msra.mxu0 %v576
  %828 = vmatprep.subr.bf16.mxu0 0
  %829 = vmatpush1.bf16.msra.mxu0 %v577
  %830 = vmatprep.subr.bf16.mxu0 0
  %831 = vmatpush1.bf16.msra.mxu0 0
  %832 = vmatprep.subr.bf16.mxu0 0
  %833 = vmatpush1.bf16.msra.mxu0 0
  %834 = vmatprep.subr.bf16.mxu0 0
  %835 = vmatpush1.bf16.msra.mxu0 0
  %836 = vmatprep.subr.bf16.mxu0 0
  %837 = vmatpush1.bf16.msra.mxu0 0
  %838 = vmatprep.subr.bf16.mxu0 0
  %839 = vmatpush1.bf16.msra.mxu0 0
  %840 = vmatprep.subr.bf16.mxu0 0
  %841 = vmatpush1.bf16.msra.mxu0 0
  %842 = vmatprep.subr.bf16.mxu0 0
  %843 = vmatpush1.bf16.msra.mxu0 0
  %844 = vmatprep.subr.bf16.mxu0 0
  %845 = vmatpush1.bf16.msra.mxu0 0
  %846 = vmatprep.mubr.bf16.mxu0 0
  %847 = vmatmul.mubr.bf16.gmra.mrb[0].mxu0 %v208
  %v848 = vpop.f32.mrb[0].mxu0
  %v849 = vadd.f32 %v808, %v848
  %v850 = vpop.f32.mrb[0].mxu0
  %v851 = vpop.f32.mrb[0].mxu0
  %v852 = vadd.f32 %v811, %v851
  %v853 = vpop.f32.mrb[0].mxu0
  %854 = vdwg.mxu0
  %v855 = vld [vmem:[%s2] sm:$0x1]
  %v857 = vlaneseq
  %v858 = vshrl.u32 %v857, 7
  %v859 = vsub.s32 0, %v858
  %v860 = vrot.slane %v855, %v859
  %v862 = vmul.f32 %v849, %v860
  %v863 = vmul.f32 %v852, %v860
  %v864 = vld [vmem:[%s3] sm:$0x1]
  %v866 = vlaneseq
  %v867 = vshrl.u32 %v866, 7
  %v868 = vsub.s32 0, %v867
  %v869 = vrot.slane %v864, %v868
  %v871 = vadd.f32 %v862, %v869
  %v872 = vadd.f32 %v863, %v869
  %v873 = vmax.f32 %v871, 0.0
  %v874 = vmax.f32 %v872, 0.0
  %v875 = vpack.c.bf16 %v874, %v873
  %v877 = vunpack.c.l.b16 %v875
  %v878 = vunpack.c.h.b16 %v875
  %v879 = vpack.c.b16 %v877, %v877
  %v880 = vpack.c.b16 %v878, %v878
  %883 = vst [vmem:[%s4] sm:$0xf] %v879
  %884 = vst [vmem:[%s4 + $0x4] sm:$0xf] %v880
  // Predicated region
  $region18: #{reference_encoder_forward.7} parent=0 // pred_check
    _
  $region19: #{reference_encoder_forward.7} parent=0 // pred_check_branch
    %886 = sbr.rel (0) target = $region21
  $region20: #{reference_encoder_forward.7} parent=0 // pred_region
    _
  $region21: #{reference_encoder_forward.7} parent=0 // pred_fallthru
    _
  // Predicated region
  $region22: #{reference_encoder_forward.7} parent=0 // pred_check
    _
  $region23: #{reference_encoder_forward.7} parent=0 // pred_check_branch
    %888 = sbr.rel (0) target = $region25
  $region24: #{reference_encoder_forward.7} parent=0 // pred_region
    _
  $region25: #{reference_encoder_forward.7} parent=0 // pred_fallthru
    _

// kernel: reference_encoder_forward.8
$region0: #{reference_encoder_forward.8}
  #allocation0 [shape = 'u32[]', space=smem, size = 0x4, offset = 0x4, fixed_abs, tag = 'smem constant byte address 0x4 - core index']
  #allocation1 [shape = 'u32[144,128]{1,0:T(1,128)}', space=vmem, size = 0x12000, scoped, tag = 'internal scratch']
  %s0 = inlined_call_operand.vmem [shape: bf16[32,256], index: 0, kind: input, shape index: {}]
  %s1 = inlined_call_operand.vmem [shape: bf16[256,128], index: 1, kind: input, shape index: {}]
  %s2 = inlined_call_operand.vmem [shape: f32[1,128], index: 2, kind: input, shape index: {}]
  %s3 = inlined_call_operand.vmem [shape: f32[32,128], index: 3, kind: output, shape index: {}]
  %s4 = sld [smem:[#allocation0]]
  $region22: #{reference_encoder_forward.8} parent=0
    _
  %s6 = ssub.s32 1, %s4
  %s7 = scalar_select 0, %s6, %s4
  // Predicated region
  $region2: #{reference_encoder_forward.8} parent=0 // pred_check
    _
  $region3: #{reference_encoder_forward.8} parent=0 // pred_check_branch
    %9 = sbr.rel (0) target = $region5
  $region4: #{reference_encoder_forward.8} parent=0 // pred_region
    _
  $region5: #{reference_encoder_forward.8} parent=0 // pred_fallthru
    _
  // Predicated region
  $region6: #{reference_encoder_forward.8} parent=0 // pred_check
    _
  $region7: #{reference_encoder_forward.8} parent=0 // pred_check_branch
    %11 = sbr.rel (0) target = $region9
  $region8: #{reference_encoder_forward.8} parent=0 // pred_region
    _
  $region9: #{reference_encoder_forward.8} parent=0 // pred_fallthru
    _
  // Predicated region
  $region10: #{reference_encoder_forward.8} parent=0 // pred_check
    _
  $region11: #{reference_encoder_forward.8} parent=0 // pred_check_branch
    %13 = sbr.rel (0) target = $region13
  $region12: #{reference_encoder_forward.8} parent=0 // pred_region
    _
  $region13: #{reference_encoder_forward.8} parent=0 // pred_fallthru
    _
  %v15 = vld [vmem:[%s0] sm:$0xff]
  %v16 = vld [vmem:[%s0 + $0x8] sm:$0xff]
  %v17 = vld [vmem:[%s0 + $0x10] sm:$0xff]
  %v18 = vld [vmem:[%s0 + $0x18] sm:$0xff]
  %v19 = vld [vmem:[%s1] sm:$0xf]
  %v20 = vld [vmem:[%s1 + $0x4] sm:$0xf]
  %v21 = vld [vmem:[%s1 + $0x8] sm:$0xf]
  %v22 = vld [vmem:[%s1 + $0xc] sm:$0xf]
  %v23 = vld [vmem:[%s1 + $0x10] sm:$0xf]
  %v24 = vld [vmem:[%s1 + $0x14] sm:$0xf]
  %v25 = vld [vmem:[%s1 + $0x18] sm:$0xf]
  %v26 = vld [vmem:[%s1 + $0x1c] sm:$0xf]
  %v27 = vld [vmem:[%s1 + $0x20] sm:$0xf]
  %v28 = vld [vmem:[%s1 + $0x24] sm:$0xf]
  %v29 = vld [vmem:[%s1 + $0x28] sm:$0xf]
  %v30 = vld [vmem:[%s1 + $0x2c] sm:$0xf]
  %v31 = vld [vmem:[%s1 + $0x30] sm:$0xf]
  %v32 = vld [vmem:[%s1 + $0x34] sm:$0xf]
  %v33 = vld [vmem:[%s1 + $0x38] sm:$0xf]
  %v34 = vld [vmem:[%s1 + $0x3c] sm:$0xf]
  %v35 = vld [vmem:[%s1 + $0x40] sm:$0xf]
  %v36 = vld [vmem:[%s1 + $0x44] sm:$0xf]
  %v37 = vld [vmem:[%s1 + $0x48] sm:$0xf]
  %v38 = vld [vmem:[%s1 + $0x4c] sm:$0xf]
  %v39 = vld [vmem:[%s1 + $0x50] sm:$0xf]
  %v40 = vld [vmem:[%s1 + $0x54] sm:$0xf]
  %v41 = vld [vmem:[%s1 + $0x58] sm:$0xf]
  %v42 = vld [vmem:[%s1 + $0x5c] sm:$0xf]
  %v43 = vld [vmem:[%s1 + $0x60] sm:$0xf]
  %v44 = vld [vmem:[%s1 + $0x64] sm:$0xf]
  %v45 = vld [vmem:[%s1 + $0x68] sm:$0xf]
  %v46 = vld [vmem:[%s1 + $0x6c] sm:$0xf]
  %v47 = vld [vmem:[%s1 + $0x70] sm:$0xf]
  %v48 = vld [vmem:[%s1 + $0x74] sm:$0xf]
  %v49 = vld [vmem:[%s1 + $0x78] sm:$0xf]
  %v50 = vld [vmem:[%s1 + $0x7c] sm:$0xf]
  %v51 = vld [vmem:[%s2] sm:$0x1]
  %v53 = vlaneseq
  %v54 = vshrl.u32 %v53, 7
  %v55 = vsub.s32 0, %v54
  %v56 = vrot.slane %v51, %v55
  %v62 = vunpack.c.l.b16 %v15
  %v63 = vunpack.c.h.b16 %v15
  %v64 = vunpack.c.l.b16 %v16
  %v65 = vunpack.c.h.b16 %v16
  %v66 = vunpack.c.l.b16 %v17
  %v67 = vunpack.c.h.b16 %v17
  %v68 = vunpack.c.l.b16 %v18
  %v69 = vunpack.c.h.b16 %v18
  %v70 = vpack.c.b16 %v64, %v62
  %v71 = vpack.c.b16 %v65, %v63
  %v72 = vpack.c.b16 %v68, %v66
  %v73 = vpack.c.b16 %v69, %v67
  %v110 = vunpack.c.l.b16 %v19
  %v111 = vunpack.c.l.b16 %v20
  %v112 = vunpack.c.l.b16 %v21
  %v113 = vunpack.c.l.b16 %v22
  %v114 = vunpack.c.l.b16 %v23
  %v115 = vunpack.c.l.b16 %v24
  %v116 = vunpack.c.l.b16 %v25
  %v117 = vunpack.c.l.b16 %v26
  %v118 = vunpack.c.l.b16 %v27
  %v119 = vunpack.c.l.b16 %v28
  %v120 = vunpack.c.l.b16 %v29
  %v121 = vunpack.c.l.b16 %v30
  %v122 = vunpack.c.l.b16 %v31
  %v123 = vunpack.c.l.b16 %v32
  %v124 = vunpack.c.l.b16 %v33
  %v125 = vunpack.c.l.b16 %v34
  %v126 = vunpack.c.l.b16 %v35
  %v127 = vunpack.c.l.b16 %v36
  %v128 = vunpack.c.l.b16 %v37
  %v129 = vunpack.c.l.b16 %v38
  %v130 = vunpack.c.l.b16 %v39
  %v131 = vunpack.c.l.b16 %v40
  %v132 = vunpack.c.l.b16 %v41
  %v133 = vunpack.c.l.b16 %v42
  %v134 = vunpack.c.l.b16 %v43
  %v135 = vunpack.c.l.b16 %v44
  %v136 = vunpack.c.l.b16 %v45
  %v137 = vunpack.c.l.b16 %v46
  %v138 = vunpack.c.l.b16 %v47
  %v139 = vunpack.c.l.b16 %v48
  %v140 = vunpack.c.l.b16 %v49
  %v141 = vunpack.c.l.b16 %v50
  %v142 = vpack.c.b16 %v111, %v110
  %v143 = vpack.c.b16 %v113, %v112
  %v144 = vpack.c.b16 %v115, %v114
  %v145 = vpack.c.b16 %v117, %v116
  %v146 = vpack.c.b16 %v119, %v118
  %v147 = vpack.c.b16 %v121, %v120
  %v148 = vpack.c.b16 %v123, %v122
  %v149 = vpack.c.b16 %v125, %v124
  %v150 = vpack.c.b16 %v127, %v126
  %v151 = vpack.c.b16 %v129, %v128
  %v152 = vpack.c.b16 %v131, %v130
  %v153 = vpack.c.b16 %v133, %v132
  %v154 = vpack.c.b16 %v135, %v134
  %v155 = vpack.c.b16 %v137, %v136
  %v156 = vpack.c.b16 %v139, %v138
  %v157 = vpack.c.b16 %v141, %v140
  %174 = vmatprep.subr.bf16.mxu0 0
  %175 = vmatpush1.bf16.msra.mxu0 %v142
  %176 = vmatprep.subr.bf16.mxu0 0
  %177 = vmatpush1.bf16.msra.mxu0 %v143
  %178 = vmatprep.subr.bf16.mxu0 0
  %179 = vmatpush1.bf16.msra.mxu0 %v144
  %180 = vmatprep.subr.bf16.mxu0 0
  %181 = vmatpush1.bf16.msra.mxu0 %v145
  %182 = vmatprep.subr.bf16.mxu0 0
  %183 = vmatpush1.bf16.msra.mxu0 %v146
  %184 = vmatprep.subr.bf16.mxu0 0
  %185 = vmatpush1.bf16.msra.mxu0 %v147
  %186 = vmatprep.subr.bf16.mxu0 0
  %187 = vmatpush1.bf16.msra.mxu0 %v148
  %188 = vmatprep.subr.bf16.mxu0 0
  %189 = vmatpush1.bf16.msra.mxu0 %v149
  %190 = vmatprep.subr.bf16.mxu0 0
  %191 = vmatpush1.bf16.msra.mxu0 %v150
  %192 = vmatprep.subr.bf16.mxu0 0
  %193 = vmatpush1.bf16.msra.mxu0 %v151
  %194 = vmatprep.subr.bf16.mxu0 0
  %195 = vmatpush1.bf16.msra.mxu0 %v152
  %196 = vmatprep.subr.bf16.mxu0 0
  %197 = vmatpush1.bf16.msra.mxu0 %v153
  %198 = vmatprep.subr.bf16.mxu0 0
  %199 = vmatpush1.bf16.msra.mxu0 %v154
  %200 = vmatprep.subr.bf16.mxu0 0
  %201 = vmatpush1.bf16.msra.mxu0 %v155
  %202 = vmatprep.subr.bf16.mxu0 0
  %203 = vmatpush1.bf16.msra.mxu0 %v156
  %204 = vmatprep.subr.bf16.mxu0 0
  %205 = vmatpush1.bf16.msra.mxu0 %v157
  %206 = vmatprep.mubr.bf16.mxu0 %v71
  %207 = vmatmul.mubr.bf16.gmra.mrb[0].mxu0 %v70
  %v208 = vpop.f32.mrb[0].mxu0
  %v209 = vadd.f32 %v56, %v208
  %v210 = vpop.f32.mrb[0].mxu0
  %v211 = vpop.f32.mrb[0].mxu0
  %v212 = vadd.f32 %v56, %v211
  %v213 = vpop.f32.mrb[0].mxu0
  %214 = vmatprep.mubr.bf16.mxu0 %v73
  %215 = vmatmul.mubr.bf16.gmra.mrb[0].mxu0 %v72
  %v216 = vpop.f32.mrb[0].mxu0
  %v217 = vadd.f32 %v56, %v216
  %v218 = vpop.f32.mrb[0].mxu0
  %v219 = vpop.f32.mrb[0].mxu0
  %v220 = vadd.f32 %v56, %v219
  %v221 = vpop.f32.mrb[0].mxu0
  %222 = vdwg.mxu0
  %223 = vst [vmem:[%s3] sm:$0xff] %v209
  %224 = vst [vmem:[%s3 + $0x8] sm:$0xff] %v212
  %225 = vst [vmem:[%s3 + $0x10] sm:$0xff] %v217
  %226 = vst [vmem:[%s3 + $0x18] sm:$0xff] %v220
  // Predicated region
  $region14: #{reference_encoder_forward.8} parent=0 // pred_check
    _
  $region15: #{reference_encoder_forward.8} parent=0 // pred_check_branch
    %228 = sbr.rel (0) target = $region17
  $region16: #{reference_encoder_forward.8} parent=0 // pred_region
    _
  $region17: #{reference_encoder_forward.8} parent=0 // pred_fallthru
    _
  // Predicated region
  $region18: #{reference_encoder_forward.8} parent=0 // pred_check
    _
  $region19: #{reference_encoder_forward.8} parent=0 // pred_check_branch
    %230 = sbr.rel (0) target = $region21
  $region20: #{reference_encoder_forward.8} parent=0 // pred_region
    _
  $region21: #{reference_encoder_forward.8} parent=0 // pred_fallthru
    _

// kernel: reference_encoder_forward.9
$region0: #{reference_encoder_forward.9}
  #allocation0 [shape = 'u32[]', space=smem, size = 0x4, offset = 0x4, fixed_abs, tag = 'smem constant byte address 0x4 - core index']
  #allocation1 [shape = 'u32[144,128]{1,0:T(1,128)}', space=vmem, size = 0x12000, scoped, tag = 'internal scratch']
  %s0 = inlined_call_operand.vmem [shape: f32[32,128], index: 0, kind: input, shape index: {}]
  %s1 = inlined_call_operand.vmem [shape: f32[32,96], index: 1, kind: input, shape index: {}]
  %s2 = inlined_call_operand.vmem [shape: f32[1,96], index: 2, kind: input, shape index: {}]
  %s3 = inlined_call_operand.vmem [shape: f32[8,32], index: 3, kind: output, shape index: {}]
  %s4 = sld [smem:[#allocation0]]
  $region29: #{reference_encoder_forward.9} parent=0
    _
  %s6 = ssub.s32 1, %s4
  %s7 = scalar_select 0, %s6, %s4
  // Predicated region
  $region2: #{reference_encoder_forward.9} parent=0 // pred_check
    _
  $region3: #{reference_encoder_forward.9} parent=0 // pred_check_branch
    %9 = sbr.rel (0) target = $region5
  $region4: #{reference_encoder_forward.9} parent=0 // pred_region
    _
  $region5: #{reference_encoder_forward.9} parent=0 // pred_fallthru
    _
  // Predicated region
  $region6: #{reference_encoder_forward.9} parent=0 // pred_check
    _
  $region7: #{reference_encoder_forward.9} parent=0 // pred_check_branch
    %11 = sbr.rel (0) target = $region9
  $region8: #{reference_encoder_forward.9} parent=0 // pred_region
    _
  $region9: #{reference_encoder_forward.9} parent=0 // pred_fallthru
    _
  // Predicated region
  $region10: #{reference_encoder_forward.9} parent=0 // pred_check
    _
  $region11: #{reference_encoder_forward.9} parent=0 // pred_check_branch
    %13 = sbr.rel (0) target = $region13
  $region12: #{reference_encoder_forward.9} parent=0 // pred_region
    _
  $region13: #{reference_encoder_forward.9} parent=0 // pred_fallthru
    _
  %v14 = vld [vmem:[%s1] sm:$0xff]
  %v15 = vld [vmem:[%s1 + $0x8] sm:$0xff]
  %v16 = vld [vmem:[%s1 + $0x10] sm:$0xff]
  %v17 = vld [vmem:[%s1 + $0x18] sm:$0xff]
  %v18 = vld [vmem:[%s2] sm:$0x1]
  loop: start=0, step=1, limit=4
  $region14: #{reference_encoder_forward.9} parent=0 // loop_pre_header
    _
  $region15: #{reference_encoder_forward.9} parent=0 // loop_header
    %s20 = sphi 0, %s24
    %p21 = scmp.ge.s32.totalorder %s20, 4
    %v25 = vphi 0.0, %v136
  $region16: #{reference_encoder_forward.9} parent=0 // loop_header_branch
    %23 = sbr.rel (%p21) target = $region20
  $region17: #{reference_encoder_forward.9} parent=0 // loop_body
    %s26 = smul.u32 %s20, 8
    %s27 = scalar_lea.vmem %s0, %s26
    %v28 = vld [vmem:[%s27] sm:$0xff]
    %v30 = vlaneseq
    %v31 = vshrl.u32 %v30, 7
    %v32 = vsub.s32 0, %v31
    %v33 = vrot.slane %v18, %v32
    %36 = vrot.lane.b32.xlu0 %v25, 96
    %v37 = vpop.permute.xlu0 %36
    %vm38 = vcmask 261120
    %v39 = vsel %vm38, %v37, 0
    %41 = vmatprep.subr.mxu0 0.0
    %42 = vmatpush1.msra.mxu0 %v14
    %43 = vmatprep.subr.mxu0 0.0
    %44 = vmatpush1.msra.mxu0 %v15
    %45 = vmatprep.subr.mxu0 0.0
    %46 = vmatpush1.msra.mxu0 %v16
    %47 = vmatprep.subr.mxu0 0.0
    %48 = vmatpush1.msra.mxu0 %v17
    %49 = vmatprep.subr.mxu0 0.0
    %50 = vmatpush1.msra.mxu0 0.0
    %51 = vmatprep.subr.mxu0 0.0
    %52 = vmatpush1.msra.mxu0 0.0
    %53 = vmatprep.subr.mxu0 0.0
    %54 = vmatpush1.msra.mxu0 0.0
    %55 = vmatprep.subr.mxu0 0.0
    %56 = vmatpush1.msra.mxu0 0.0
    %57 = vmatprep.subr.mxu0 0.0
    %58 = vmatpush1.msra.mxu0 0.0
    %59 = vmatprep.subr.mxu0 0.0
    %60 = vmatpush1.msra.mxu0 0.0
    %61 = vmatprep.subr.mxu0 0.0
    %62 = vmatpush1.msra.mxu0 0.0
    %63 = vmatprep.subr.mxu0 0.0
    %64 = vmatpush1.msra.mxu0 0.0
    %65 = vmatprep.subr.mxu0 0.0
    %66 = vmatpush1.msra.mxu0 0.0
    %67 = vmatprep.subr.mxu0 0.0
    %68 = vmatpush1.msra.mxu0 0.0
    %69 = vmatprep.subr.mxu0 0.0
    %70 = vmatpush1.msra.mxu0 0.0
    %71 = vmatprep.subr.mxu0 0.0
    %72 = vmatpush1.msra.mxu0 0.0
    %73 = vmatprep.subr.mxu0 0.0
    %74 = vmatpush1.msra.mxu0 0.0
    %75 = vmatprep.subr.mxu0 0.0
    %76 = vmatpush1.msra.mxu0 0.0
    %77 = vmatprep.subr.mxu0 0.0
    %78 = vmatpush1.msra.mxu0 0.0
    %79 = vmatprep.subr.mxu0 0.0
    %80 = vmatpush1.msra.mxu0 0.0
    %81 = vmatprep.subr.mxu0 0.0
    %82 = vmatpush1.msra.mxu0 0.0
    %83 = vmatprep.subr.mxu0 0.0
    %84 = vmatpush1.msra.mxu0 0.0
    %85 = vmatprep.subr.mxu0 0.0
    %86 = vmatpush1.msra.mxu0 0.0
    %87 = vmatprep.subr.mxu0 0.0
    %88 = vmatpush1.msra.mxu0 0.0
    %89 = vmatprep.subr.mxu0 0.0
    %90 = vmatpush1.msra.mxu0 0.0
    %91 = vmatprep.subr.mxu0 0.0
    %92 = vmatpush1.msra.mxu0 0.0
    %93 = vmatprep.subr.mxu0 0.0
    %94 = vmatpush1.msra.mxu0 0.0
    %95 = vmatprep.subr.mxu0 0.0
    %96 = vmatpush1.msra.mxu0 0.0
    %97 = vmatprep.subr.mxu0 0.0
    %98 = vmatpush1.msra.mxu0 0.0
    %99 = vmatprep.subr.mxu0 0.0
    %100 = vmatpush1.msra.mxu0 0.0
    %101 = vmatprep.subr.mxu0 0.0
    %102 = vmatpush1.msra.mxu0 0.0
    %103 = vmatprep.subr.mxu0 0.0
    %104 = vmatpush1.msra.mxu0 0.0
    %105 = vmatprep.mubr.f32.mxu0 0.0
    %106 = vmatmul.mubr.f32.gmra.mrb[0].mxu0 %v39
    %v107 = vpop.f32.mrb[0].mxu0
    %v108 = vadd.f32 %v33, %v107
    %v109 = vpop.f32.mrb[0].mxu0
    %110 = vdwg.mxu0
    %v111 = vadd.f32 %v28, %v108
    %v112 = vxor.u32 %v111, 2147483648
    %v113 = vmul.f32 %v112, 1.442695
    %v114 = vpow.pop %v113
    %v115 = vadd.f32 %v114, 1.0
    %v116 = vrcp.pop %v115
    %v117 = vmul.f32 1.0, %v116
    %119 = vrot.lane.b32.xlu0 %v108, 64
    %v120 = vpop.permute.xlu0 %119
    %v122 = vmul.f32 %v117, %v120
    %124 = vrot.lane.b32.xlu0 %v122, 64
    %v125 = vpop.permute.xlu0 %124
    %v127 = vadd.f32 %v28, %v125
    %v128 = vtanh.pop %v127
    %v129 = vsub.f32 1.0, %v117
    %131 = vrot.lane.b32.xlu0 %v128, 96
    %v132 = vpop.permute.xlu0 %131
    %v134 = vmul.f32 %v129, %v132
    %v135 = vmul.f32 %v117, %v25
    %v136 = vadd.f32 %v134, %v135
  $region18: #{reference_encoder_forward.9} parent=0 // loop_footer
    %s24 = sadd.s32 1, %s20
  $region19: #{reference_encoder_forward.9} parent=0 // loop_footer_branch
    %19 = sbr.rel target = $region15
  $region20: #{reference_encoder_forward.9} parent=0 // loop_exit
    _
  %138 = vrot.lane.b32.xlu0 %v25, 96
  %v139 = vpop.permute.xlu0 %138
  %vm141 = vcmask 261120
  %142 = vst.msk [vmem:[%s3] sm:$0xff] %vm141, %v139
  // Predicated region
  $region21: #{reference_encoder_forward.9} parent=0 // pred_check
    _
  $region22: #{reference_encoder_forward.9} parent=0 // pred_check_branch
    %144 = sbr.rel (0) target = $region24
  $region23: #{reference_encoder_forward.9} parent=0 // pred_region
    _
  $region24: #{reference_encoder_forward.9} parent=0 // pred_fallthru
    _
  // Predicated region
  $region25: #{reference_encoder_forward.9} parent=0 // pred_check
    _
  $region26: #{reference_encoder_forward.9} parent=0 // pred_check_branch
    %146 = sbr.rel (0) target = $region28
  $region27: #{reference_encoder_forward.9} parent=0 // pred_region
    _
  $region28: #{reference_encoder_forward.9} parent=0 // pred_fallthru
    _

</llo_original>
